<compile_context>
chip_gen: v5e
topology: v5e:2x2
jax: 0.10.0
libtpu: 0.0.40
codegen_flags: <defaults>
</compile_context>

<pallas_src>
import math

import jax
import jax.numpy as jnp
from jax.experimental import pallas as pl
from jax.experimental.pallas import tpu as pltpu

# Small shapes consistent with the module's forward.
B, S, H, V = 2, 8, 32, 128            # batch, seq (incl. [CLS]/[SEP]), hidden, vocab
NUM_HEADS, HEAD_DIM, FFN = 4, 8, 64
IGNORE_INDEX = -100                   # torch F.cross_entropy default

# Packed-weight layout.
WPACK_LANES = 4 * 128                 # [w_qkv | wo | w1 | w_cls], each 128-lane aligned
# spack rows: 0..S-1 = pos_emb, then bias / LayerNorm rows.
ROW_BQKV, ROW_BO = S, S + 1
ROW_LN1G, ROW_LN1B = S + 2, S + 3
ROW_B1, ROW_B2 = S + 4, S + 5
ROW_LN2G, ROW_LN2B = S + 6, S + 7
ROW_BCLS = S + 8
SPACK_ROWS = S + 9


def _layernorm(x, g, b, eps=1e-12):
    mu = jnp.mean(x, axis=-1, keepdims=True)
    xc = x - mu
    var = jnp.mean(xc * xc, axis=-1, keepdims=True)
    return xc * jax.lax.rsqrt(var + eps) * g + b


# ----------------------------------------------------------------------------
# Trace-time helper shared by both kernels: one batch row per grid step.
# TODO(synk): the real module runs the 12-layer pretrained bert-base-chinese;
#             a single synthetic encoder layer stands in for it here.
# ----------------------------------------------------------------------------
def _forward_one_batch(ids_ref, tok_emb_ref, wpack_ref, w2_ref, spack_ref):
    # --- embedding gather as a one-hot MXU matmul (fused, no HBM round trip)
    ids = ids_ref[0]                                                 # (S, 1) int32
    col = jax.lax.broadcasted_iota(jnp.int32, (S, V), 1)
    onehot = jnp.where(col == ids, 1.0, 0.0).astype(jnp.bfloat16)    # (S, V)
    pos = spack_ref[0:S, 0:H]                                        # (S, H) f32
    x = jnp.dot(onehot, tok_emb_ref[...],
                preferred_element_type=jnp.float32) + pos            # (S, H) f32

    # --- fused Q/K/V projection: one MXU pass, bf16 inputs / f32 accumulate
    qkv = jnp.dot(x.astype(jnp.bfloat16), wpack_ref[:, 0:3 * H],
                  preferred_element_type=jnp.float32)
    qkv = qkv + spack_ref[ROW_BQKV:ROW_BQKV + 1, 0:3 * H]            # (S, 3H) f32

    # --- batched multi-head attention (no per-head Python loop)
    def heads(lo):                                                   # (NH, S, HD)
        return jnp.swapaxes(qkv[:, lo:lo + H].reshape(S, NUM_HEADS, HEAD_DIM), 0, 1)
    q, k, v = heads(0), heads(H), heads(2 * H)
    # tiny K=8 contractions: kept f32 (clean layouts); the big dots are bf16
    s = jnp.einsum("hqd,hkd->hqk", q, k,
                   preferred_element_type=jnp.float32) * (1.0 / math.sqrt(HEAD_DIM))
    s = s - jnp.max(s, axis=-1, keepdims=True)
    p = jnp.exp(s)
    # approx reciprocal runs on the EUP; small stated deviation from exact softmax
    p = p * pl.reciprocal(jnp.sum(p, axis=-1, keepdims=True), approx=True)
    ctx = jnp.einsum("hqk,hkd->hqd", p, v,
                     preferred_element_type=jnp.float32)             # (NH, S, HD)
    ctx = jnp.swapaxes(ctx, 0, 1).reshape(S, H)                      # (S, H)
    attn = jnp.dot(ctx.astype(jnp.bfloat16), wpack_ref[:, 128:128 + H],
                   preferred_element_type=jnp.float32)
    attn = attn + spack_ref[ROW_BO:ROW_BO + 1, 0:H]

    h1 = _layernorm(x + attn,
                    spack_ref[ROW_LN1G:ROW_LN1G + 1, 0:H],
                    spack_ref[ROW_LN1B:ROW_LN1B + 1, 0:H])

    # --- feed-forward
    ff = jnp.dot(h1.astype(jnp.bfloat16), wpack_ref[:, 256:256 + FFN],
                 preferred_element_type=jnp.float32)
    ff = ff + spack_ref[ROW_B1:ROW_B1 + 1, 0:FFN]
    # TODO(synk): bert-base uses the erf-based GELU; tanh approximation kept.
    ff = jax.nn.gelu(ff, approximate=True)
    ff = jnp.dot(ff.astype(jnp.bfloat16), w2_ref[...],
                 preferred_element_type=jnp.float32)
    ff = ff + spack_ref[ROW_B2:ROW_B2 + 1, 0:H]
    h2 = _layernorm(h1 + ff,
                    spack_ref[ROW_LN2G:ROW_LN2G + 1, 0:H],
                    spack_ref[ROW_LN2B:ROW_LN2B + 1, 0:H])

    # --- classifier over the full sequence; [CLS]/[SEP] handling is done by
    #     the caller (wrapper-side slice / in-kernel row mask) so the HBM
    #     store stays full-tile aligned.
    logits = jnp.dot(h2.astype(jnp.bfloat16), wpack_ref[:, 384:384 + V],
                     preferred_element_type=jnp.float32)
    logits = logits + spack_ref[ROW_BCLS:ROW_BCLS + 1, 0:V]
    return logits                                                    # (S, V) f32


# ----------------------------------------------------------------------------
# Kernels
# ----------------------------------------------------------------------------
def logits_kernel(ids_ref, tok_emb_ref, wpack_ref, w2_ref, spack_ref, out_ref):
    out_ref[0] = _forward_one_batch(ids_ref, tok_emb_ref, wpack_ref, w2_ref, spack_ref)


def loss_kernel(ids_ref, labels_ref, tok_emb_ref, wpack_ref, w2_ref, spack_ref, out_ref):
    logits = _forward_one_batch(ids_ref, tok_emb_ref, wpack_ref, w2_ref, spack_ref)
    labels = labels_ref[0]                                           # (S, 1) int32

    # numerically-stable cross-entropy over the vocab axis (f32)
    m = jnp.max(logits, axis=-1, keepdims=True)
    lse = jnp.log(jnp.sum(jnp.exp(logits - m), axis=-1, keepdims=True)) + m
    col = jax.lax.broadcasted_iota(jnp.int32, (S, V), 1)
    tgt = jnp.sum(jnp.where(col == labels, logits, 0.0), axis=-1, keepdims=True)

    # drop [CLS]/[SEP] rows via a row mask (no sublane-offset slice) and honour
    # torch's ignore_index=-100.
    row = jax.lax.broadcasted_iota(jnp.int32, (S, 1), 0)
    valid = (row >= 1) & (row <= S - 2) & (labels != IGNORE_INDEX)
    per_tok = jnp.where(valid, lse - tgt, 0.0)                       # (S, 1)

    bsum = jnp.sum(per_tok, axis=0, keepdims=True)                   # (1, 1)
    bcnt = jnp.sum(valid.astype(jnp.float32), axis=0, keepdims=True) # (1, 1)
    out_ref[0] = jnp.concatenate([bsum, bcnt], axis=1)               # (1, 2)


# ----------------------------------------------------------------------------
# Parameter init (deterministic), packing, and end-to-end forward.
# ----------------------------------------------------------------------------
def init_params(key):
    ks = jax.random.split(key, 7)
    std = 0.02
    return {
        "tok_emb": jax.random.normal(ks[0], (V, H), jnp.float32) * std,
        "pos_emb": jax.random.normal(ks[1], (S, H), jnp.float32) * std,
        "w_qkv": jax.random.normal(ks[2], (H, 3 * H), jnp.float32) * std,
        "b_qkv": jnp.zeros((1, 3 * H), jnp.float32),
        "wo": jax.random.normal(ks[3], (H, H), jnp.float32) * std,
        "bo": jnp.zeros((1, H), jnp.float32),
        "ln1g": jnp.ones((1, H), jnp.float32),
        "ln1b": jnp.zeros((1, H), jnp.float32),
        "w1": jax.random.normal(ks[4], (H, FFN), jnp.float32) * std,
        "b1": jnp.zeros((1, FFN), jnp.float32),
        "w2": jax.random.normal(ks[5], (FFN, H), jnp.float32) * std,
        "b2": jnp.zeros((1, H), jnp.float32),
        "ln2g": jnp.ones((1, H), jnp.float32),
        "ln2b": jnp.zeros((1, H), jnp.float32),
        "w_cls": jax.random.normal(ks[6], (H, V), jnp.float32) * std,
        "b_cls": jnp.zeros((1, V), jnp.float32),
    }


def pack_params(p):
    """Pack all logical weights into 4 kernel inputs (done once at trace time)."""
    def lane_pad(a, w=128):
        return jnp.pad(a, ((0, 0), (0, w - a.shape[1])))
    # Matmul weights, each starting on a 128-lane boundary -> aligned ref slices.
    wpack = jnp.concatenate(
        [lane_pad(p["w_qkv"]), lane_pad(p["wo"]), lane_pad(p["w1"]), p["w_cls"]],
        axis=1).astype(jnp.bfloat16)                                 # (H, 512) bf16
    # pos_emb + every bias / LayerNorm row in one lane-dense f32 slab.
    spack = jnp.concatenate(
        [lane_pad(p["pos_emb"]),
         lane_pad(p["b_qkv"]), lane_pad(p["bo"]),
         lane_pad(p["ln1g"]), lane_pad(p["ln1b"]),
         lane_pad(p["b1"]), lane_pad(p["b2"]),
         lane_pad(p["ln2g"]), lane_pad(p["ln2b"]),
         p["b_cls"]], axis=0).astype(jnp.float32)                    # (17, 128) f32
    return (p["tok_emb"].astype(jnp.bfloat16), wpack,
            p["w2"].astype(jnp.bfloat16), spack)


def language_model_forward(packed, x, y=None):
    tok_emb, wpack, w2, spack = packed
    assert x.shape == (B, S)
    ids3 = x.astype(jnp.int32).reshape(B, S, 1)

    # Constant-index weight blocks are DMA'd once and stay resident across the grid.
    weight_specs = [
        pl.BlockSpec((V, H), lambda b: (0, 0)),             # tok_emb (bf16)
        pl.BlockSpec((H, WPACK_LANES), lambda b: (0, 0)),   # packed matmul weights
        pl.BlockSpec((FFN, H), lambda b: (0, 0)),           # w2
        pl.BlockSpec((SPACK_ROWS, 128), lambda b: (0, 0)),  # pos_emb + biases + LN
    ]
    # "parallel" batch grid -> megacore sharding on v7x, neutral on v5e/v6e.
    cparams = pltpu.CompilerParams(dimension_semantics=("parallel",))
    # TODO(synk): at real bert-base-chinese sizes (H=768, V=21128) the classifier
    #             must be vocab-tiled with a pipelined grid + vmem_limit_bytes.

    if y is None:
        logits_full = pl.pallas_call(
            logits_kernel,
            grid=(B,),
            in_specs=[pl.BlockSpec((1, S, 1), lambda b: (b, 0, 0))] + weight_specs,
            out_specs=pl.BlockSpec((1, S, V), lambda b: (b, 0, 0)),
            out_shape=jax.ShapeDtypeStruct((B, S, V), jnp.float32),
            compiler_params=cparams,
        )(ids3, tok_emb, wpack, w2, spack)
        # Drop [CLS]/[SEP] outside the kernel: the kernel's only HBM store stays
        # unmasked / lane-dense; this tiny wrapper slice is essentially free.
        return logits_full[:, 1:-1, :]

    labels3 = y.astype(jnp.int32).reshape(B, S, 1)
    partial = pl.pallas_call(
        loss_kernel,
        grid=(B,),
        in_specs=[pl.BlockSpec((1, S, 1), lambda b: (b, 0, 0)),
                  pl.BlockSpec((1, S, 1), lambda b: (b, 0, 0))] + weight_specs,
        out_specs=pl.BlockSpec((1, 1, 2), lambda b: (b, 0, 0)),
        out_shape=jax.ShapeDtypeStruct((B, 1, 2), jnp.float32),
        compiler_params=cparams,
    )(ids3, labels3, tok_emb, wpack, w2, spack)
    # Per-program (sum, count) partials -> mean in the wrapper (megacore-safe).
    total = jnp.sum(partial[:, 0, 0])
    count = jnp.sum(partial[:, 0, 1])
    return total / jnp.maximum(count, 1.0)


if __name__ == "__main__":
    key = jax.random.PRNGKey(0)
    pkey, xkey, ykey = jax.random.split(key, 3)
    params = init_params(pkey)
    packed = pack_params(params)

    x = jax.random.randint(xkey, (B, S), 0, V, dtype=jnp.int32)   # token ids
    y = jax.random.randint(ykey, (B, S), 0, V, dtype=jnp.int32)   # labels

    logits = language_model_forward(packed, x)                    # (B, S-2, V)
    loss = language_model_forward(packed, x, y)                   # scalar

    jax.block_until_ready(logits)
    jax.block_until_ready(loss)

    assert logits.shape == (B, S - 2, V)
    assert loss.shape == ()
    assert bool(jnp.isfinite(loss))
    print("KERNEL_OK")
</pallas_src>

<mosaic_0001>
module attributes {stable_mosaic.version = 11 : i64} {
  func.func @logits_kernel(%arg0: i32, %arg1: memref<1x8x1xi32, #tpu.memory_space<vmem>>, %arg2: memref<128x32xbf16, #tpu.memory_space<vmem>>, %arg3: memref<32x512xbf16, #tpu.memory_space<vmem>>, %arg4: memref<64x32xbf16, #tpu.memory_space<vmem>>, %arg5: memref<17x128xf32, #tpu.memory_space<vmem>>, %arg6: memref<1x8x128xf32, #tpu.memory_space<vmem>>) attributes {dimension_semantics = [#tpu.dimension_semantics<parallel>], iteration_bounds = array<i64: 2>, scalar_prefetch = 0 : i64, scratch_operands = 0 : i64, tpu.core_type = #tpu.core_type<tc>, window_params = [{transform_indices = @transform_0, window_bounds = array<i64: 1, 8, 1>}, {pipeline_mode = #tpu.pipeline_mode<synchronous>, transform_indices = @transform_1, window_bounds = array<i64: 128, 32>}, {pipeline_mode = #tpu.pipeline_mode<synchronous>, transform_indices = @transform_2, window_bounds = array<i64: 32, 512>}, {pipeline_mode = #tpu.pipeline_mode<synchronous>, transform_indices = @transform_3, window_bounds = array<i64: 64, 32>}, {pipeline_mode = #tpu.pipeline_mode<synchronous>, transform_indices = @transform_4, window_bounds = array<i64: 17, 128>}, {transform_indices = @transform_5, window_bounds = array<i64: 1, 8, 128>}]} {
    %c0 = arith.constant 0 : index
    %c0_0 = arith.constant 0 : index
    %c0_1 = arith.constant 0 : index
    %0 = vector.load %arg1[%c0, %c0_0, %c0_1] : memref<1x8x1xi32, #tpu.memory_space<vmem>>, vector<1x8x1xi32>
    %1 = vector.shape_cast %0 : vector<1x8x1xi32> to vector<8x1xi32>
    %2 = tpu.iota {dimensions = array<i32: 1>} : vector<8x128xi32>
    %3 = vector.broadcast %1 : vector<8x1xi32> to vector<8x128xi32>
    %4 = arith.cmpi eq, %2, %3 : vector<8x128xi32>
    %cst = arith.constant 1.000000e+00 : f32
    %cst_2 = arith.constant 0.000000e+00 : f32
    %5 = vector.broadcast %cst : f32 to vector<8x128xf32>
    %6 = vector.broadcast %cst_2 : f32 to vector<8x128xf32>
    %7 = arith.select %4, %5, %6 : vector<8x128xi1>, vector<8x128xf32>
    %8 = arith.truncf %7 : vector<8x128xf32> to vector<8x128xbf16>
    %c0_3 = arith.constant 0 : index
    %c0_4 = arith.constant 0 : index
    %9 = vector.load %arg5[%c0_3, %c0_4] : memref<17x128xf32, #tpu.memory_space<vmem>>, vector<8x32xf32>
    %c0_5 = arith.constant 0 : index
    %c0_6 = arith.constant 0 : index
    %10 = vector.load %arg2[%c0_5, %c0_6] : memref<128x32xbf16, #tpu.memory_space<vmem>>, vector<128x32xbf16>
    %cst_7 = arith.constant dense<0.000000e+00> : vector<8x32xf32>
    %11 = tpu.matmul %8, %10, %cst_7 {dimension_numbers = #tpu.dot_dimension_numbers<[1], [0], [0], [1], [0, 0, 1, 1], [], []>} : vector<8x128xbf16>, vector<128x32xbf16>, vector<8x32xf32> -> vector<8x32xf32>
    %12 = arith.addf %11, %9 : vector<8x32xf32>
    %13 = arith.truncf %12 : vector<8x32xf32> to vector<8x32xbf16>
    %c0_8 = arith.constant 0 : index
    %c0_9 = arith.constant 0 : index
    %14 = vector.load %arg3[%c0_8, %c0_9] : memref<32x512xbf16, #tpu.memory_space<vmem>>, vector<32x96xbf16>
    %cst_10 = arith.constant dense<0.000000e+00> : vector<8x96xf32>
    %15 = tpu.matmul %13, %14, %cst_10 {dimension_numbers = #tpu.dot_dimension_numbers<[1], [0], [0], [1], [0, 0, 1, 1], [], []>} : vector<8x32xbf16>, vector<32x96xbf16>, vector<8x96xf32> -> vector<8x96xf32>
    %c8 = arith.constant 8 : index
    %c0_11 = arith.constant 0 : index
    %16 = vector.load %arg5[%c8, %c0_11] : memref<17x128xf32, #tpu.memory_space<vmem>>, vector<1x96xf32>
    %17 = vector.broadcast %16 : vector<1x96xf32> to vector<8x96xf32>
    %18 = arith.addf %15, %17 : vector<8x96xf32>
    %19 = vector.extract_strided_slice %18 {offsets = [0, 0], sizes = [8, 32], strides = [1, 1]} : vector<8x96xf32> to vector<8x32xf32>
    %20 = vector.shape_cast %19 : vector<8x32xf32> to vector<8x4x8xf32>
    %21 = tpu.transpose %20, [1, 0, 2] : vector<8x4x8xf32> -> vector<4x8x8xf32>
    %22 = vector.extract_strided_slice %18 {offsets = [0, 32], sizes = [8, 32], strides = [1, 1]} : vector<8x96xf32> to vector<8x32xf32>
    %23 = vector.shape_cast %22 : vector<8x32xf32> to vector<8x4x8xf32>
    %24 = tpu.transpose %23, [1, 0, 2] : vector<8x4x8xf32> -> vector<4x8x8xf32>
    %25 = vector.extract_strided_slice %18 {offsets = [0, 64], sizes = [8, 32], strides = [1, 1]} : vector<8x96xf32> to vector<8x32xf32>
    %26 = vector.shape_cast %25 : vector<8x32xf32> to vector<8x4x8xf32>
    %27 = tpu.transpose %26, [1, 0, 2] : vector<8x4x8xf32> -> vector<4x8x8xf32>
    "tpu.trace_start"() <{level = 10 : i32, message = "hqd,hkd->hqk"}> : () -> ()
    %cst_12 = arith.constant dense<0.000000e+00> : vector<4x8x8xf32>
    %28 = tpu.matmul %21, %24, %cst_12 {dimension_numbers = #tpu.dot_dimension_numbers<[2], [2], [1], [1], [0, 0, 0, 1, 1, 1], [0], [0]>} : vector<4x8x8xf32>, vector<4x8x8xf32>, vector<4x8x8xf32> -> vector<4x8x8xf32>
    "tpu.trace_stop"() : () -> ()
    %cst_13 = arith.constant 0.353553385 : f32
    %29 = vector.broadcast %cst_13 : f32 to vector<4x8x8xf32>
    %30 = arith.mulf %28, %29 : vector<4x8x8xf32>
    %cst_14 = arith.constant dense<0xFF800000> : vector<4x8xf32>
    %31 = vector.multi_reduction <maximumf>, %30, %cst_14 [2] : vector<4x8x8xf32> to vector<4x8xf32>
    %32 = vector.shape_cast %31 : vector<4x8xf32> to vector<4x8x1xf32>
    %33 = vector.broadcast %32 : vector<4x8x1xf32> to vector<4x8x8xf32>
    %34 = arith.subf %30, %33 : vector<4x8x8xf32>
    %35 = math.exp %34 : vector<4x8x8xf32>
    %cst_15 = arith.constant dense<0.000000e+00> : vector<4x8xf32>
    %36 = vector.multi_reduction <add>, %35, %cst_15 [2] : vector<4x8x8xf32> to vector<4x8xf32>
    %37 = vector.shape_cast %36 : vector<4x8xf32> to vector<4x8x1xf32>
    %38 = tpu.reciprocal %37 {approx = true} : vector<4x8x1xf32> -> vector<4x8x1xf32>
    %39 = vector.broadcast %38 : vector<4x8x1xf32> to vector<4x8x8xf32>
    %40 = arith.mulf %35, %39 : vector<4x8x8xf32>
    "tpu.trace_start"() <{level = 10 : i32, message = "hqk,hkd->hqd"}> : () -> ()
    %cst_16 = arith.constant dense<0.000000e+00> : vector<4x8x8xf32>
    %41 = tpu.matmul %40, %27, %cst_16 {dimension_numbers = #tpu.dot_dimension_numbers<[2], [1], [1], [2], [0, 0, 0, 1, 1, 2], [0], [0]>} : vector<4x8x8xf32>, vector<4x8x8xf32>, vector<4x8x8xf32> -> vector<4x8x8xf32>
    "tpu.trace_stop"() : () -> ()
    %42 = tpu.transpose %41, [1, 0, 2] : vector<4x8x8xf32> -> vector<8x4x8xf32>
    %43 = vector.shape_cast %42 : vector<8x4x8xf32> to vector<8x32xf32>
    %44 = arith.truncf %43 : vector<8x32xf32> to vector<8x32xbf16>
    %c0_17 = arith.constant 0 : index
    %c128 = arith.constant 128 : index
    %45 = vector.load %arg3[%c0_17, %c128] : memref<32x512xbf16, #tpu.memory_space<vmem>>, vector<32x32xbf16>
    %cst_18 = arith.constant dense<0.000000e+00> : vector<8x32xf32>
    %46 = tpu.matmul %44, %45, %cst_18 {dimension_numbers = #tpu.dot_dimension_numbers<[1], [0], [0], [1], [0, 0, 1, 1], [], []>} : vector<8x32xbf16>, vector<32x32xbf16>, vector<8x32xf32> -> vector<8x32xf32>
    %c9 = arith.constant 9 : index
    %c0_19 = arith.constant 0 : index
    %47 = vector.load %arg5[%c9, %c0_19] : memref<17x128xf32, #tpu.memory_space<vmem>>, vector<1x32xf32>
    %48 = vector.broadcast %47 : vector<1x32xf32> to vector<8x32xf32>
    %49 = arith.addf %46, %48 : vector<8x32xf32>
    %50 = arith.addf %12, %49 : vector<8x32xf32>
    %c10 = arith.constant 10 : index
    %c0_20 = arith.constant 0 : index
    %51 = vector.load %arg5[%c10, %c0_20] : memref<17x128xf32, #tpu.memory_space<vmem>>, vector<1x32xf32>
    %c11 = arith.constant 11 : index
    %c0_21 = arith.constant 0 : index
    %52 = vector.load %arg5[%c11, %c0_21] : memref<17x128xf32, #tpu.memory_space<vmem>>, vector<1x32xf32>
    %cst_22 = arith.constant dense<0.000000e+00> : vector<8xf32>
    %53 = vector.multi_reduction <add>, %50, %cst_22 [1] : vector<8x32xf32> to vector<8xf32>
    %54 = vector.shape_cast %53 : vector<8xf32> to vector<8x1xf32>
    %cst_23 = arith.constant 3.200000e+01 : f32
    %55 = vector.broadcast %cst_23 : f32 to vector<8x1xf32>
    %56 = arith.divf %54, %55 : vector<8x1xf32>
    %57 = vector.broadcast %56 : vector<8x1xf32> to vector<8x32xf32>
    %58 = arith.subf %50, %57 : vector<8x32xf32>
    %59 = arith.mulf %58, %58 : vector<8x32xf32>
    %cst_24 = arith.constant dense<0.000000e+00> : vector<8xf32>
    %60 = vector.multi_reduction <add>, %59, %cst_24 [1] : vector<8x32xf32> to vector<8xf32>
    %61 = vector.shape_cast %60 : vector<8xf32> to vector<8x1xf32>
    %cst_25 = arith.constant 3.200000e+01 : f32
    %62 = vector.broadcast %cst_25 : f32 to vector<8x1xf32>
    %63 = arith.divf %61, %62 : vector<8x1xf32>
    %cst_26 = arith.constant 9.99999996E-13 : f32
    %64 = vector.broadcast %cst_26 : f32 to vector<8x1xf32>
    %65 = arith.addf %63, %64 : vector<8x1xf32>
    %66 = math.rsqrt %65 : vector<8x1xf32>
    %67 = vector.broadcast %66 : vector<8x1xf32> to vector<8x32xf32>
    %68 = arith.mulf %58, %67 : vector<8x32xf32>
    %69 = vector.broadcast %51 : vector<1x32xf32> to vector<8x32xf32>
    %70 = arith.mulf %68, %69 : vector<8x32xf32>
    %71 = vector.broadcast %52 : vector<1x32xf32> to vector<8x32xf32>
    %72 = arith.addf %70, %71 : vector<8x32xf32>
    %73 = arith.truncf %72 : vector<8x32xf32> to vector<8x32xbf16>
    %c0_27 = arith.constant 0 : index
    %c256 = arith.constant 256 : index
    %74 = vector.load %arg3[%c0_27, %c256] : memref<32x512xbf16, #tpu.memory_space<vmem>>, vector<32x64xbf16>
    %cst_28 = arith.constant dense<0.000000e+00> : vector<8x64xf32>
    %75 = tpu.matmul %73, %74, %cst_28 {dimension_numbers = #tpu.dot_dimension_numbers<[1], [0], [0], [1], [0, 0, 1, 1], [], []>} : vector<8x32xbf16>, vector<32x64xbf16>, vector<8x64xf32> -> vector<8x64xf32>
    %c12 = arith.constant 12 : index
    %c0_29 = arith.constant 0 : index
    %76 = vector.load %arg5[%c12, %c0_29] : memref<17x128xf32, #tpu.memory_space<vmem>>, vector<1x64xf32>
    %77 = vector.broadcast %76 : vector<1x64xf32> to vector<8x64xf32>
    %78 = arith.addf %75, %77 : vector<8x64xf32>
    %79 = arith.mulf %78, %78 : vector<8x64xf32>
    %80 = arith.mulf %78, %79 : vector<8x64xf32>
    %cst_30 = arith.constant 4.471500e-02 : f32
    %81 = vector.broadcast %cst_30 : f32 to vector<8x64xf32>
    %82 = arith.mulf %81, %80 : vector<8x64xf32>
    %83 = arith.addf %78, %82 : vector<8x64xf32>
    %cst_31 = arith.constant 0.797884583 : f32
    %84 = vector.broadcast %cst_31 : f32 to vector<8x64xf32>
    %85 = arith.mulf %84, %83 : vector<8x64xf32>
    %86 = math.tanh %85 : vector<8x64xf32>
    %cst_32 = arith.constant 1.000000e+00 : f32
    %87 = vector.broadcast %cst_32 : f32 to vector<8x64xf32>
    %88 = arith.addf %87, %86 : vector<8x64xf32>
    %cst_33 = arith.constant 5.000000e-01 : f32
    %89 = vector.broadcast %cst_33 : f32 to vector<8x64xf32>
    %90 = arith.mulf %89, %88 : vector<8x64xf32>
    %91 = arith.mulf %78, %90 : vector<8x64xf32>
    %92 = arith.truncf %91 : vector<8x64xf32> to vector<8x64xbf16>
    %c0_34 = arith.constant 0 : index
    %c0_35 = arith.constant 0 : index
    %93 = vector.load %arg4[%c0_34, %c0_35] : memref<64x32xbf16, #tpu.memory_space<vmem>>, vector<64x32xbf16>
    %cst_36 = arith.constant dense<0.000000e+00> : vector<8x32xf32>
    %94 = tpu.matmul %92, %93, %cst_36 {dimension_numbers = #tpu.dot_dimension_numbers<[1], [0], [0], [1], [0, 0, 1, 1], [], []>} : vector<8x64xbf16>, vector<64x32xbf16>, vector<8x32xf32> -> vector<8x32xf32>
    %c13 = arith.constant 13 : index
    %c0_37 = arith.constant 0 : index
    %95 = vector.load %arg5[%c13, %c0_37] : memref<17x128xf32, #tpu.memory_space<vmem>>, vector<1x32xf32>
    %96 = vector.broadcast %95 : vector<1x32xf32> to vector<8x32xf32>
    %97 = arith.addf %94, %96 : vector<8x32xf32>
    %98 = arith.addf %72, %97 : vector<8x32xf32>
    %c14 = arith.constant 14 : index
    %c0_38 = arith.constant 0 : index
    %99 = vector.load %arg5[%c14, %c0_38] : memref<17x128xf32, #tpu.memory_space<vmem>>, vector<1x32xf32>
    %c15 = arith.constant 15 : index
    %c0_39 = arith.constant 0 : index
    %100 = vector.load %arg5[%c15, %c0_39] : memref<17x128xf32, #tpu.memory_space<vmem>>, vector<1x32xf32>
    %cst_40 = arith.constant dense<0.000000e+00> : vector<8xf32>
    %101 = vector.multi_reduction <add>, %98, %cst_40 [1] : vector<8x32xf32> to vector<8xf32>
    %102 = vector.shape_cast %101 : vector<8xf32> to vector<8x1xf32>
    %cst_41 = arith.constant 3.200000e+01 : f32
    %103 = vector.broadcast %cst_41 : f32 to vector<8x1xf32>
    %104 = arith.divf %102, %103 : vector<8x1xf32>
    %105 = vector.broadcast %104 : vector<8x1xf32> to vector<8x32xf32>
    %106 = arith.subf %98, %105 : vector<8x32xf32>
    %107 = arith.mulf %106, %106 : vector<8x32xf32>
    %cst_42 = arith.constant dense<0.000000e+00> : vector<8xf32>
    %108 = vector.multi_reduction <add>, %107, %cst_42 [1] : vector<8x32xf32> to vector<8xf32>
    %109 = vector.shape_cast %108 : vector<8xf32> to vector<8x1xf32>
    %cst_43 = arith.constant 3.200000e+01 : f32
    %110 = vector.broadcast %cst_43 : f32 to vector<8x1xf32>
    %111 = arith.divf %109, %110 : vector<8x1xf32>
    %cst_44 = arith.constant 9.99999996E-13 : f32
    %112 = vector.broadcast %cst_44 : f32 to vector<8x1xf32>
    %113 = arith.addf %111, %112 : vector<8x1xf32>
    %114 = math.rsqrt %113 : vector<8x1xf32>
    %115 = vector.broadcast %114 : vector<8x1xf32> to vector<8x32xf32>
    %116 = arith.mulf %106, %115 : vector<8x32xf32>
    %117 = vector.broadcast %99 : vector<1x32xf32> to vector<8x32xf32>
    %118 = arith.mulf %116, %117 : vector<8x32xf32>
    %119 = vector.broadcast %100 : vector<1x32xf32> to vector<8x32xf32>
    %120 = arith.addf %118, %119 : vector<8x32xf32>
    %121 = arith.truncf %120 : vector<8x32xf32> to vector<8x32xbf16>
    %c0_45 = arith.constant 0 : index
    %c384 = arith.constant 384 : index
    %122 = vector.load %arg3[%c0_45, %c384] : memref<32x512xbf16, #tpu.memory_space<vmem>>, vector<32x128xbf16>
    %cst_46 = arith.constant dense<0.000000e+00> : vector<8x128xf32>
    %123 = tpu.matmul %121, %122, %cst_46 {dimension_numbers = #tpu.dot_dimension_numbers<[1], [0], [0], [1], [0, 0, 1, 1], [], []>} : vector<8x32xbf16>, vector<32x128xbf16>, vector<8x128xf32> -> vector<8x128xf32>
    %c16 = arith.constant 16 : index
    %c0_47 = arith.constant 0 : index
    %124 = vector.load %arg5[%c16, %c0_47] : memref<17x128xf32, #tpu.memory_space<vmem>>, vector<1x128xf32>
    %125 = vector.broadcast %124 : vector<1x128xf32> to vector<8x128xf32>
    %126 = arith.addf %123, %125 : vector<8x128xf32>
    %c0_48 = arith.constant 0 : index
    %c0_49 = arith.constant 0 : index
    %c0_50 = arith.constant 0 : index
    %127 = vector.load %arg6[%c0_48, %c0_49, %c0_50] : memref<1x8x128xf32, #tpu.memory_space<vmem>>, vector<1x8x128xf32>
    %128 = vector.shape_cast %127 : vector<1x8x128xf32> to vector<8x128xf32>
    %129 = vector.shape_cast %126 : vector<8x128xf32> to vector<1x8x128xf32>
    tpu.vector_store %arg6[%c0_48, %c0_49, %c0_50], %129 {strides = array<i32>} : memref<1x8x128xf32, #tpu.memory_space<vmem>>, vector<1x8x128xf32>,
    return
  }
  func.func @transform_0(%arg0: i32) -> (i32, i32, i32) {
    %c0_i32 = arith.constant 0 : i32
    %c0_i32_0 = arith.constant 0 : i32
    %c0_i32_1 = arith.constant 0 : i32
    return %arg0, %c0_i32, %c0_i32_0 : i32, i32, i32
  }
  func.func @transform_1(%arg0: i32) -> (i32, i32) {
    %c0_i32 = arith.constant 0 : i32
    %c0_i32_0 = arith.constant 0 : i32
    %c0_i32_1 = arith.constant 0 : i32
    return %c0_i32, %c0_i32_0 : i32, i32
  }
  func.func @transform_2(%arg0: i32) -> (i32, i32) {
    %c0_i32 = arith.constant 0 : i32
    %c0_i32_0 = arith.constant 0 : i32
    %c0_i32_1 = arith.constant 0 : i32
    return %c0_i32, %c0_i32_0 : i32, i32
  }
  func.func @transform_3(%arg0: i32) -> (i32, i32) {
    %c0_i32 = arith.constant 0 : i32
    %c0_i32_0 = arith.constant 0 : i32
    %c0_i32_1 = arith.constant 0 : i32
    return %c0_i32, %c0_i32_0 : i32, i32
  }
  func.func @transform_4(%arg0: i32) -> (i32, i32) {
    %c0_i32 = arith.constant 0 : i32
    %c0_i32_0 = arith.constant 0 : i32
    %c0_i32_1 = arith.constant 0 : i32
    return %c0_i32, %c0_i32_0 : i32, i32
  }
  func.func @transform_5(%arg0: i32) -> (i32, i32, i32) {
    %c0_i32 = arith.constant 0 : i32
    %c0_i32_0 = arith.constant 0 : i32
    %c0_i32_1 = arith.constant 0 : i32
    return %arg0, %c0_i32, %c0_i32_0 : i32, i32, i32
  }
}

</mosaic_0001>

<llo_original>
// kernel: tpu_custom_call.1
$region0: #{tpu_custom_call.1}
  #allocation0 [shape = 'u32[]', space=smem, size = 0x4, offset = 0x4, fixed_abs, tag = 'smem constant byte address 0x4 - core index']
  #allocation1 [shape = 'u32[72,128]{1,0:T(1,128)}', space=vmem, size = 0x9000, scoped, tag = 'internal scratch']
  %s0 = inlined_call_operand.vmem [shape: s32[2,8,1], index: 0, kind: input, shape index: {}]
  %s1 = inlined_call_operand.vmem [shape: bf16[128,32], index: 1, kind: input, shape index: {}]
  %s2 = inlined_call_operand.vmem [shape: bf16[32,512], index: 2, kind: input, shape index: {}]
  %s3 = inlined_call_operand.vmem [shape: bf16[64,32], index: 3, kind: input, shape index: {}]
  %s4 = inlined_call_operand.vmem [shape: f32[17,128], index: 4, kind: input, shape index: {}]
  %s5 = inlined_call_operand.hbm [shape: f32[2,8,128], index: 5, kind: output, shape index: {}]
  %s6 = sld [smem:[#allocation0]]
  $region53: #{tpu_custom_call.1} parent=0
    _
  %s8 = ssub.s32 1, %s6
  %s9 = scalar_select 0, %s8, %s6
  $region1: #{tpu_custom_call.1} parent=0
    #allocation2 [shape = 'u8[8192]{0}', space=vmem, size = 0x2000, scoped, tag = 'output window, operand 0']
    #allocation3 [shape = 's32[2]{0}', space=sflag, size = 0x8, scoped, tag = 'scoped memory for tpu_custom_call.1']
    %10 = vsyncpa [#allocation3], 0
    %s11 = scalar_lea.sflag [#allocation3], 1
    %12 = vsyncpa %s11, 0
    loop: start=0, step=1, limit=4
    $region2: #{tpu_custom_call.1} parent=1 // loop_pre_header
      _
    $region3: #{tpu_custom_call.1} parent=1 // loop_header
      %s14 = sphi 0, %s18
      %p15 = scmp.ge.s32.totalorder %s14, 4
      %s24 = sphi 0, %s26
      %s27 = sphi 0, %s24
      %s28 = sphi 0, %s27
      %s44 = sphi 0, %s28
      %s48 = sphi 0, %s48
      %s50 = sphi 0, %s48
      %s51 = sphi 0, %s50
      %s65 = sphi 0, %s51
      %s69 = sphi 0, %s69
      %s71 = sphi 0, %s69
      %s72 = sphi 0, %s71
      %s86 = sphi 0, %s72
      %s90 = sphi 0, %s90
      %s92 = sphi 0, %s90
      %s93 = sphi 0, %s92
      %s107 = sphi 0, %s93
      %s111 = sphi 0, %s111
      %s113 = sphi 0, %s111
      %s114 = sphi 0, %s113
      %s128 = sphi 0, %s114
      %s134 = sphi 0, %s136
      %s137 = sphi 0, %s134
      %s138 = sphi 0, %s137
      %s154 = sphi 0, %s138
    $region4: #{tpu_custom_call.1} parent=1 // loop_header_branch
      %17 = sbr.rel (%p15) target = $region8
    $region5: #{tpu_custom_call.1} parent=1 // loop_body
      %s19 = ssub.s32 %s14, 1
      %s20 = ssub.s32 %s14, 2
      %s21 = sadd.s32 %s14, 1
      %s22 = ssub.s32 %s14, %s21
      %p23 = scmp.eq.s32.totalorder %s22, 0
      %s25 = sadd.s32 %s24, 1
      %s26 = scalar_select %p23, %s24, %s25
      %p29 = pneg %p23
      %p30 = scmp.eq.s32.totalorder %s14, 1
      %p31 = por %p29, %p30
      %p32 = scmp.ne.s32.totalorder %s24, %s27
      %p33 = scmp.eq.s32.totalorder %s14, 0
      %p34 = por %p32, %p33
      %p35 = scmp.ne.s32.totalorder %s24, %s27
      %p36 = scmp.eq.s32.totalorder %s19, 1
      %p37 = por %p35, %p36
      %p38 = scmp.ne.s32.totalorder %s27, %s28
      %p39 = scmp.eq.s32.totalorder %s19, 0
      %p40 = por %p38, %p39
      %p41 = scmp.ne.s32.totalorder %s27, %s28
      %p42 = scmp.eq.s32.totalorder %s20, 1
      %p43 = por %p41, %p42
      %p45 = scmp.ne.s32.totalorder %s28, %s44
      %p46 = scmp.eq.s32.totalorder %s20, 0
      %p47 = por %p45, %p46
      %s49 = sadd.s32 %s48, 1
      %p52 = scmp.eq.s32.totalorder %s14, 1
      %p53 = scmp.ne.s32.totalorder %s48, %s50
      %p54 = scmp.eq.s32.totalorder %s14, 0
      %p55 = por %p53, %p54
      %p56 = scmp.ne.s32.totalorder %s48, %s50
      %p57 = scmp.eq.s32.totalorder %s19, 1
      %p58 = por %p56, %p57
      %p59 = scmp.ne.s32.totalorder %s50, %s51
      %p60 = scmp.eq.s32.totalorder %s19, 0
      %p61 = por %p59, %p60
      %p62 = scmp.ne.s32.totalorder %s50, %s51
      %p63 = scmp.eq.s32.totalorder %s20, 1
      %p64 = por %p62, %p63
      %p66 = scmp.ne.s32.totalorder %s51, %s65
      %p67 = scmp.eq.s32.totalorder %s20, 0
      %p68 = por %p66, %p67
      %s70 = sadd.s32 %s69, 1
      %p73 = scmp.eq.s32.totalorder %s14, 1
      %p74 = scmp.ne.s32.totalorder %s69, %s71
      %p75 = scmp.eq.s32.totalorder %s14, 0
      %p76 = por %p74, %p75
      %p77 = scmp.ne.s32.totalorder %s69, %s71
      %p78 = scmp.eq.s32.totalorder %s19, 1
      %p79 = por %p77, %p78
      %p80 = scmp.ne.s32.totalorder %s71, %s72
      %p81 = scmp.eq.s32.totalorder %s19, 0
      %p82 = por %p80, %p81
      %p83 = scmp.ne.s32.totalorder %s71, %s72
      %p84 = scmp.eq.s32.totalorder %s20, 1
      %p85 = por %p83, %p84
      %p87 = scmp.ne.s32.totalorder %s72, %s86
      %p88 = scmp.eq.s32.totalorder %s20, 0
      %p89 = por %p87, %p88
      %s91 = sadd.s32 %s90, 1
      %p94 = scmp.eq.s32.totalorder %s14, 1
      %p95 = scmp.ne.s32.totalorder %s90, %s92
      %p96 = scmp.eq.s32.totalorder %s14, 0
      %p97 = por %p95, %p96
      %p98 = scmp.ne.s32.totalorder %s90, %s92
      %p99 = scmp.eq.s32.totalorder %s19, 1
      %p100 = por %p98, %p99
      %p101 = scmp.ne.s32.totalorder %s92, %s93
      %p102 = scmp.eq.s32.totalorder %s19, 0
      %p103 = por %p101, %p102
      %p104 = scmp.ne.s32.totalorder %s92, %s93
      %p105 = scmp.eq.s32.totalorder %s20, 1
      %p106 = por %p104, %p105
      %p108 = scmp.ne.s32.totalorder %s93, %s107
      %p109 = scmp.eq.s32.totalorder %s20, 0
      %p110 = por %p108, %p109
      %s112 = sadd.s32 %s111, 1
      %p115 = scmp.eq.s32.totalorder %s14, 1
      %p116 = scmp.ne.s32.totalorder %s111, %s113
      %p117 = scmp.eq.s32.totalorder %s14, 0
      %p118 = por %p116, %p117
      %p119 = scmp.ne.s32.totalorder %s111, %s113
      %p120 = scmp.eq.s32.totalorder %s19, 1
      %p121 = por %p119, %p120
      %p122 = scmp.ne.s32.totalorder %s113, %s114
      %p123 = scmp.eq.s32.totalorder %s19, 0
      %p124 = por %p122, %p123
      %p125 = scmp.ne.s32.totalorder %s113, %s114
      %p126 = scmp.eq.s32.totalorder %s20, 1
      %p127 = por %p125, %p126
      %p129 = scmp.ne.s32.totalorder %s114, %s128
      %p130 = scmp.eq.s32.totalorder %s20, 0
      %p131 = por %p129, %p130
      %s132 = ssub.s32 %s14, %s21
      %p133 = scmp.eq.s32.totalorder %s132, 0
      %s135 = sadd.s32 %s134, 1
      %s136 = scalar_select %p133, %s134, %s135
      %p139 = pneg %p133
      %p140 = scmp.eq.s32.totalorder %s14, 1
      %p141 = por %p139, %p140
      %p142 = scmp.ne.s32.totalorder %s134, %s137
      %p143 = scmp.eq.s32.totalorder %s14, 0
      %p144 = por %p142, %p143
      %p145 = scmp.ne.s32.totalorder %s134, %s137
      %p146 = scmp.eq.s32.totalorder %s19, 1
      %p147 = por %p145, %p146
      %p148 = scmp.ne.s32.totalorder %s137, %s138
      %p149 = scmp.eq.s32.totalorder %s19, 0
      %p150 = por %p148, %p149
      %p151 = scmp.ne.s32.totalorder %s137, %s138
      %p152 = scmp.eq.s32.totalorder %s20, 1
      %p153 = por %p151, %p152
      %p155 = scmp.ne.s32.totalorder %s138, %s154
      %p156 = scmp.eq.s32.totalorder %s20, 0
      %p157 = por %p155, %p156
      %p158 = scmp.le.s32.totalorder 1, %s14
      %p159 = scmp.lt.s32.totalorder %s14, 3
      %p160 = pnand %p158, %p159
      %p161 = pneg %p160
      // Predicated region
      $region9: #{tpu_custom_call.1} parent=5 // pred_check
        _
      $region10: #{tpu_custom_call.1} parent=5 // pred_check_branch
        %163 = sbr.rel (%p160) target = $region12
      $region11: #{tpu_custom_call.1} parent=5 // pred_region
        %s164 = ssub.s32 %s14, 1
        // Predicated region
        $region13: #{tpu_custom_call.1} parent=11 // pred_check
          %p165 = pneg %p61
        $region14: #{tpu_custom_call.1} parent=11 // pred_check_branch
          %167 = sbr.rel (%p165) target = $region16
        $region15: #{tpu_custom_call.1} parent=11 // pred_region
          _
        $region16: #{tpu_custom_call.1} parent=11 // pred_fallthru
          _
        // Predicated region
        $region17: #{tpu_custom_call.1} parent=11 // pred_check
          %p168 = pneg %p82
        $region18: #{tpu_custom_call.1} parent=11 // pred_check_branch
          %170 = sbr.rel (%p168) target = $region20
        $region19: #{tpu_custom_call.1} parent=11 // pred_region
          _
        $region20: #{tpu_custom_call.1} parent=11 // pred_fallthru
          _
        // Predicated region
        $region21: #{tpu_custom_call.1} parent=11 // pred_check
          %p171 = pneg %p103
        $region22: #{tpu_custom_call.1} parent=11 // pred_check_branch
          %173 = sbr.rel (%p171) target = $region24
        $region23: #{tpu_custom_call.1} parent=11 // pred_region
          _
        $region24: #{tpu_custom_call.1} parent=11 // pred_fallthru
          _
        // Predicated region
        $region25: #{tpu_custom_call.1} parent=11 // pred_check
          %p174 = pneg %p124
        $region26: #{tpu_custom_call.1} parent=11 // pred_check_branch
          %176 = sbr.rel (%p174) target = $region28
        $region27: #{tpu_custom_call.1} parent=11 // pred_region
          _
        $region28: #{tpu_custom_call.1} parent=11 // pred_fallthru
          _
      $region12: #{tpu_custom_call.1} parent=5 // pred_fallthru
        _
      %p177 = scmp.lt.s32.totalorder %s14, 2
      // Predicated region
      $region29: #{tpu_custom_call.1} parent=5 // pred_check
        %p178 = pneg %p177
      $region30: #{tpu_custom_call.1} parent=5 // pred_check_branch
        %180 = sbr.rel (%p178) target = $region32
      $region31: #{tpu_custom_call.1} parent=5 // pred_region
        // Predicated region
        $region33: #{tpu_custom_call.1} parent=31 // pred_check
          %p181 = pneg %p34
        $region34: #{tpu_custom_call.1} parent=31 // pred_check_branch
          %183 = sbr.rel (%p181) target = $region36
        $region35: #{tpu_custom_call.1} parent=31 // pred_region
          %p184 = scmp.lt.s32.totalorder %s14, 1
          %s185 = scalar_select %p184, %s14, 1
          %s186 = smul.addr %s185, 8
          %s187 = scalar_lea.vmem %s0, %s186
        $region36: #{tpu_custom_call.1} parent=31 // pred_fallthru
          _
      $region32: #{tpu_custom_call.1} parent=5 // pred_fallthru
        _
      %p188 = scmp.le.s32.totalorder 1, %s14
      %p189 = scmp.lt.s32.totalorder %s14, 3
      %p190 = pnand %p188, %p189
      %p191 = pneg %p190
      // Predicated region
      $region37: #{tpu_custom_call.1} parent=5 // pred_check
        _
      $region38: #{tpu_custom_call.1} parent=5 // pred_check_branch
        %193 = sbr.rel (%p190) target = $region40
      $region39: #{tpu_custom_call.1} parent=5 // pred_region
        %s194 = ssub.s32 %s14, 1
        %p195 = scmp.lt.s32.totalorder %s19, 1
        %s196 = scalar_select %p195, %s19, 1
        %s197 = smul.addr %s196, 8
        %s198 = scalar_lea.vmem %s0, %s197
        %p199 = pneg %p40
        %p200 = pneg %p37
        %p201 = pneg %p61
        %p202 = pneg %p58
        %p203 = pneg %p82
        %p204 = pneg %p79
        %p205 = pneg %p103
        %p206 = pneg %p100
        %p207 = pneg %p124
        %p208 = pneg %p121
        %p209 = pneg %p150
        %p210 = pneg %p147
        %s211 = sand.u32 %s137, 1
        %s212 = scalar_lea.sflag [#allocation3], %s211
        %s213 = sand.u32 %s137, 1
        %s214 = smul.addr %s213, 8
        %s215 = scalar_lea.vmem [#allocation2], %s214
        %p216 = scmp.lt.s32.totalorder %s19, 1
        %s217 = scalar_select %p216, %s19, 1
        %s218 = smul.addr %s217, 8
        %s219 = scalar_lea.vmem %s0, %s218
        %v221 = vld [vmem:[%s219] sm:$0xff]
        %v222 = vlaneseq
        %v223 = vand.u32 %v222, 127
        %224 = vset.pattern.permute.xlu0 0
        %225 = vperm.xlu0 %224, %v221
        %v226 = vpop.permute.xlu0 %225
        %vm227 = vcmp.eq.s32.totalorder %v223, %v226
        %v228 = vsel %vm227, 1.0, 0.0
        %v229 = vpack.c.bf16 %v228, %v228
        %v230 = vld [vmem:[%s4] sm:$0xff]
        %v231 = vld [vmem:[%s1] sm:$0xf]
        %v232 = vld [vmem:[%s1 + $0x4] sm:$0xf]
        %v233 = vld [vmem:[%s1 + $0x8] sm:$0xf]
        %v234 = vld [vmem:[%s1 + $0xc] sm:$0xf]
        %v235 = vld [vmem:[%s1 + $0x10] sm:$0xf]
        %v236 = vld [vmem:[%s1 + $0x14] sm:$0xf]
        %v237 = vld [vmem:[%s1 + $0x18] sm:$0xf]
        %v238 = vld [vmem:[%s1 + $0x1c] sm:$0xf]
        %v239 = vld [vmem:[%s1 + $0x20] sm:$0xf]
        %v240 = vld [vmem:[%s1 + $0x24] sm:$0xf]
        %v241 = vld [vmem:[%s1 + $0x28] sm:$0xf]
        %v242 = vld [vmem:[%s1 + $0x2c] sm:$0xf]
        %v243 = vld [vmem:[%s1 + $0x30] sm:$0xf]
        %v244 = vld [vmem:[%s1 + $0x34] sm:$0xf]
        %v245 = vld [vmem:[%s1 + $0x38] sm:$0xf]
        %v246 = vld [vmem:[%s1 + $0x3c] sm:$0xf]
        %v263 = vunpack.c.l.b16 %v231
        %v264 = vunpack.c.l.b16 %v232
        %v265 = vunpack.c.l.b16 %v233
        %v266 = vunpack.c.l.b16 %v234
        %v267 = vunpack.c.l.b16 %v235
        %v268 = vunpack.c.l.b16 %v236
        %v269 = vunpack.c.l.b16 %v237
        %v270 = vunpack.c.l.b16 %v238
        %v271 = vunpack.c.l.b16 %v239
        %v272 = vunpack.c.l.b16 %v240
        %v273 = vunpack.c.l.b16 %v241
        %v274 = vunpack.c.l.b16 %v242
        %v275 = vunpack.c.l.b16 %v243
        %v276 = vunpack.c.l.b16 %v244
        %v277 = vunpack.c.l.b16 %v245
        %v278 = vunpack.c.l.b16 %v246
        %v279 = vpack.c.b16 %v264, %v263
        %v280 = vpack.c.b16 %v266, %v265
        %v281 = vpack.c.b16 %v268, %v267
        %v282 = vpack.c.b16 %v270, %v269
        %v283 = vpack.c.b16 %v272, %v271
        %v284 = vpack.c.b16 %v274, %v273
        %v285 = vpack.c.b16 %v276, %v275
        %v286 = vpack.c.b16 %v278, %v277
        %295 = vmatpush.bf16.msra.mxu0 %v286
        %296 = vmatpush.bf16.msra.mxu0 %v285
        %297 = vmatpush.bf16.msra.mxu0 %v284
        %298 = vmatpush.bf16.msra.mxu0 %v283
        %299 = vmatpush.bf16.msra.mxu0 %v282
        %300 = vmatpush.bf16.msra.mxu0 %v281
        %301 = vmatpush.bf16.msra.mxu0 %v280
        %302 = vmatpush.bf16.msra.mxu0 %v279
        %303 = vmatmul.bf16.gmra.mxu0 %v229
        %v304 = vpop.f32.mrf.mxu0
        %v305 = vadd.f32 %v230, %v304
        %v306 = vpop.f32.mrf.mxu0
        %307 = vdwg.mxu0
        %v308 = vpack.c.bf16 %v305, %v305
        %v309 = vld [vmem:[%s2] sm:$0xf]
        %v310 = vld [vmem:[%s2 + $0x10] sm:$0xf]
        %v311 = vld [vmem:[%s2 + $0x20] sm:$0xf]
        %v312 = vld [vmem:[%s2 + $0x30] sm:$0xf]
        %v313 = vld [vmem:[%s4 + $0x8] sm:$0x1]
        %v314 = vperm.slane %v313, 0
        %v319 = vunpack.c.l.b16 %v309
        %v320 = vunpack.c.l.b16 %v310
        %v321 = vunpack.c.l.b16 %v311
        %v322 = vunpack.c.l.b16 %v312
        %v323 = vpack.c.b16 %v320, %v319
        %v324 = vpack.c.b16 %v322, %v321
        %vm327 = vcmask 261120
        %v329 = vsel %vm327, %v308, 0
        %331 = vmatpush.bf16.msra.mxu0 0
        %332 = vmatpush.bf16.msra.mxu0 0
        %333 = vmatpush.bf16.msra.mxu0 0
        %334 = vmatpush.bf16.msra.mxu0 0
        %335 = vmatpush.bf16.msra.mxu0 0
        %336 = vmatpush.bf16.msra.mxu0 0
        %337 = vmatpush.bf16.msra.mxu0 %v324
        %338 = vmatpush.bf16.msra.mxu0 %v323
        %339 = vmatmul.bf16.gmra.mxu0 %v329
        %v340 = vpop.f32.mrf.mxu0
        %v341 = vadd.f32 %v314, %v340
        %v342 = vpop.f32.mrf.mxu0
        %343 = vdwg.mxu0
        %345 = vrot.lane.b32.xlu0 %v341, 120
        %v346 = vpop.permute.xlu0 %345
        %348 = vrot.lane.b32.xlu0 %v341, 112
        %v349 = vpop.permute.xlu0 %348
        %351 = vrot.lane.b32.xlu0 %v341, 104
        %v352 = vpop.permute.xlu0 %351
        %v354 = vrot.slane %v349, 4
        %vm355 = vcmask 1047556
        %v356 = vsel %vm355, %v354, %v341
        %v357 = vrot.slane %v341, 4
        %v358 = vsel %vm355, %v349, %v357
        %v360 = vunpack.c.l.s4 1983009808
        %v361 = vunpack.c.0.s8 %v360
        %v362 = vperm.slane %v356, %v361
        %v364 = vunpack.c.l.s4 1983009808
        %v365 = vunpack.c.0.s8 %v364
        %v366 = vperm.slane %v358, %v365
        %v367 = vrot.slane %v352, 4
        %v368 = vsel %vm355, %v367, %v346
        %v369 = vrot.slane %v346, 4
        %v370 = vsel %vm355, %v352, %v369
        %v372 = vunpack.c.l.s4 1983009808
        %v373 = vunpack.c.0.s8 %v372
        %v374 = vperm.slane %v368, %v373
        %v376 = vunpack.c.l.s4 1983009808
        %v377 = vunpack.c.0.s8 %v376
        %v378 = vperm.slane %v370, %v377
        %v379 = vrot.slane %v374, 4
        %v380 = vsel %vm355, %v379, %v362
        %v381 = vrot.slane %v362, 4
        %v382 = vsel %vm355, %v374, %v381
        %v384 = vunpack.c.l.s4 1934713408
        %v385 = vunpack.c.0.s8 %v384
        %v386 = vperm.slane %v380, %v385
        %v388 = vunpack.c.l.s4 1934713408
        %v389 = vunpack.c.0.s8 %v388
        %v390 = vperm.slane %v382, %v389
        %v391 = vrot.slane %v378, 4
        %v392 = vsel %vm355, %v391, %v366
        %v393 = vrot.slane %v366, 4
        %v394 = vsel %vm355, %v378, %v393
        %v396 = vunpack.c.l.s4 1934713408
        %v397 = vunpack.c.0.s8 %v396
        %v398 = vperm.slane %v392, %v397
        %v400 = vunpack.c.l.s4 1934713408
        %v401 = vunpack.c.0.s8 %v400
        %v402 = vperm.slane %v394, %v401
        %v403 = vrot.slane %v386, 4
        %v404 = vsel %vm355, 0.0, %v403
        %v405 = vrot.slane %v390, 4
        %v406 = vsel %vm355, 0.0, %v405
        %v407 = vrot.slane %v398, 4
        %v408 = vsel %vm355, 0.0, %v407
        %v409 = vrot.slane %v402, 4
        %v410 = vsel %vm355, 0.0, %v409
        %v411 = vsel %vm355, %v405, %v386
        %v413 = vunpack.c.l.s4 1983009808
        %v414 = vunpack.c.0.s8 %v413
        %v415 = vperm.slane %v411, %v414
        %v416 = vrot.slane %v406, 4
        %v417 = vsel %vm355, %v416, %v404
        %v419 = vunpack.c.l.s4 1983009808
        %v420 = vunpack.c.0.s8 %v419
        %v421 = vperm.slane %v417, %v420
        %v422 = vsel %vm355, %v409, %v398
        %v424 = vunpack.c.l.s4 1983009808
        %v425 = vunpack.c.0.s8 %v424
        %v426 = vperm.slane %v422, %v425
        %v427 = vrot.slane %v410, 4
        %v428 = vsel %vm355, %v427, %v408
        %v430 = vunpack.c.l.s4 1983009808
        %v431 = vunpack.c.0.s8 %v430
        %v432 = vperm.slane %v428, %v431
        %v433 = vrot.slane %v421, 4
        %v434 = vsel %vm355, %v433, %v415
        %v435 = vrot.slane %v415, 4
        %v436 = vsel %vm355, %v421, %v435
        %v438 = vunpack.c.l.s4 1934713408
        %v439 = vunpack.c.0.s8 %v438
        %v440 = vperm.slane %v434, %v439
        %v442 = vunpack.c.l.s4 1934713408
        %v443 = vunpack.c.0.s8 %v442
        %v444 = vperm.slane %v436, %v443
        %v445 = vrot.slane %v432, 4
        %v446 = vsel %vm355, %v445, %v426
        %v447 = vrot.slane %v426, 4
        %v448 = vsel %vm355, %v432, %v447
        %v450 = vunpack.c.l.s4 1934713408
        %v451 = vunpack.c.0.s8 %v450
        %v452 = vperm.slane %v446, %v451
        %v454 = vunpack.c.l.s4 1934713408
        %v455 = vunpack.c.0.s8 %v454
        %v456 = vperm.slane %v448, %v455
        %v457 = vrot.slane %v452, 4
        %v458 = vsel %vm355, %v457, %v440
        %v459 = vrot.slane %v440, 4
        %v460 = vsel %vm355, %v452, %v459
        %v461 = vrot.slane %v456, 4
        %v462 = vsel %vm355, %v461, %v444
        %v463 = vrot.slane %v444, 4
        %v464 = vsel %vm355, %v456, %v463
        %465 = vrot.lane.b32.xlu0 %v341, 96
        %v466 = vpop.permute.xlu0 %465
        %467 = vrot.lane.b32.xlu0 %v346, 96
        %v468 = vpop.permute.xlu0 %467
        %469 = vrot.lane.b32.xlu0 %v349, 96
        %v470 = vpop.permute.xlu0 %469
        %471 = vrot.lane.b32.xlu0 %v352, 96
        %v472 = vpop.permute.xlu0 %471
        %v477 = vrot.slane %v470, 4
        %v478 = vsel %vm355, %v477, %v466
        %v479 = vrot.slane %v466, 4
        %v480 = vsel %vm355, %v470, %v479
        %v482 = vunpack.c.l.s4 1983009808
        %v483 = vunpack.c.0.s8 %v482
        %v484 = vperm.slane %v478, %v483
        %v486 = vunpack.c.l.s4 1983009808
        %v487 = vunpack.c.0.s8 %v486
        %v488 = vperm.slane %v480, %v487
        %v489 = vrot.slane %v472, 4
        %v490 = vsel %vm355, %v489, %v468
        %v491 = vrot.slane %v468, 4
        %v492 = vsel %vm355, %v472, %v491
        %v494 = vunpack.c.l.s4 1983009808
        %v495 = vunpack.c.0.s8 %v494
        %v496 = vperm.slane %v490, %v495
        %v498 = vunpack.c.l.s4 1983009808
        %v499 = vunpack.c.0.s8 %v498
        %v500 = vperm.slane %v492, %v499
        %v501 = vrot.slane %v496, 4
        %v502 = vsel %vm355, %v501, %v484
        %v503 = vrot.slane %v484, 4
        %v504 = vsel %vm355, %v496, %v503
        %v506 = vunpack.c.l.s4 1934713408
        %v507 = vunpack.c.0.s8 %v506
        %v508 = vperm.slane %v502, %v507
        %v510 = vunpack.c.l.s4 1934713408
        %v511 = vunpack.c.0.s8 %v510
        %v512 = vperm.slane %v504, %v511
        %v513 = vrot.slane %v500, 4
        %v514 = vsel %vm355, %v513, %v488
        %v515 = vrot.slane %v488, 4
        %v516 = vsel %vm355, %v500, %v515
        %v518 = vunpack.c.l.s4 1934713408
        %v519 = vunpack.c.0.s8 %v518
        %v520 = vperm.slane %v514, %v519
        %v522 = vunpack.c.l.s4 1934713408
        %v523 = vunpack.c.0.s8 %v522
        %v524 = vperm.slane %v516, %v523
        %v525 = vrot.slane %v508, 4
        %v526 = vsel %vm355, 0.0, %v525
        %v527 = vrot.slane %v512, 4
        %v528 = vsel %vm355, 0.0, %v527
        %v529 = vrot.slane %v520, 4
        %v530 = vsel %vm355, 0.0, %v529
        %v531 = vrot.slane %v524, 4
        %v532 = vsel %vm355, 0.0, %v531
        %v533 = vsel %vm355, %v527, %v508
        %v535 = vunpack.c.l.s4 1983009808
        %v536 = vunpack.c.0.s8 %v535
        %v537 = vperm.slane %v533, %v536
        %v538 = vrot.slane %v528, 4
        %v539 = vsel %vm355, %v538, %v526
        %v541 = vunpack.c.l.s4 1983009808
        %v542 = vunpack.c.0.s8 %v541
        %v543 = vperm.slane %v539, %v542
        %v544 = vsel %vm355, %v531, %v520
        %v546 = vunpack.c.l.s4 1983009808
        %v547 = vunpack.c.0.s8 %v546
        %v548 = vperm.slane %v544, %v547
        %v549 = vrot.slane %v532, 4
        %v550 = vsel %vm355, %v549, %v530
        %v552 = vunpack.c.l.s4 1983009808
        %v553 = vunpack.c.0.s8 %v552
        %v554 = vperm.slane %v550, %v553
        %v555 = vrot.slane %v543, 4
        %v556 = vsel %vm355, %v555, %v537
        %v557 = vrot.slane %v537, 4
        %v558 = vsel %vm355, %v543, %v557
        %v560 = vunpack.c.l.s4 1934713408
        %v561 = vunpack.c.0.s8 %v560
        %v562 = vperm.slane %v556, %v561
        %v564 = vunpack.c.l.s4 1934713408
        %v565 = vunpack.c.0.s8 %v564
        %v566 = vperm.slane %v558, %v565
        %v567 = vrot.slane %v554, 4
        %v568 = vsel %vm355, %v567, %v548
        %v569 = vrot.slane %v548, 4
        %v570 = vsel %vm355, %v554, %v569
        %v572 = vunpack.c.l.s4 1934713408
        %v573 = vunpack.c.0.s8 %v572
        %v574 = vperm.slane %v568, %v573
        %v576 = vunpack.c.l.s4 1934713408
        %v577 = vunpack.c.0.s8 %v576
        %v578 = vperm.slane %v570, %v577
        %v579 = vrot.slane %v574, 4
        %v580 = vsel %vm355, %v579, %v562
        %v581 = vrot.slane %v562, 4
        %v582 = vsel %vm355, %v574, %v581
        %v583 = vrot.slane %v578, 4
        %v584 = vsel %vm355, %v583, %v566
        %v585 = vrot.slane %v566, 4
        %v586 = vsel %vm355, %v578, %v585
        %587 = vrot.lane.b32.xlu0 %v341, 64
        %v588 = vpop.permute.xlu0 %587
        %589 = vrot.lane.b32.xlu0 %v346, 64
        %v590 = vpop.permute.xlu0 %589
        %591 = vrot.lane.b32.xlu0 %v349, 64
        %v592 = vpop.permute.xlu0 %591
        %593 = vrot.lane.b32.xlu0 %v352, 64
        %v594 = vpop.permute.xlu0 %593
        %v599 = vrot.slane %v592, 4
        %v600 = vsel %vm355, %v599, %v588
        %v601 = vrot.slane %v588, 4
        %v602 = vsel %vm355, %v592, %v601
        %v604 = vunpack.c.l.s4 1983009808
        %v605 = vunpack.c.0.s8 %v604
        %v606 = vperm.slane %v600, %v605
        %v608 = vunpack.c.l.s4 1983009808
        %v609 = vunpack.c.0.s8 %v608
        %v610 = vperm.slane %v602, %v609
        %v611 = vrot.slane %v594, 4
        %v612 = vsel %vm355, %v611, %v590
        %v613 = vrot.slane %v590, 4
        %v614 = vsel %vm355, %v594, %v613
        %v616 = vunpack.c.l.s4 1983009808
        %v617 = vunpack.c.0.s8 %v616
        %v618 = vperm.slane %v612, %v617
        %v620 = vunpack.c.l.s4 1983009808
        %v621 = vunpack.c.0.s8 %v620
        %v622 = vperm.slane %v614, %v621
        %v623 = vrot.slane %v618, 4
        %v624 = vsel %vm355, %v623, %v606
        %v625 = vrot.slane %v606, 4
        %v626 = vsel %vm355, %v618, %v625
        %v628 = vunpack.c.l.s4 1934713408
        %v629 = vunpack.c.0.s8 %v628
        %v630 = vperm.slane %v624, %v629
        %v632 = vunpack.c.l.s4 1934713408
        %v633 = vunpack.c.0.s8 %v632
        %v634 = vperm.slane %v626, %v633
        %v635 = vrot.slane %v622, 4
        %v636 = vsel %vm355, %v635, %v610
        %v637 = vrot.slane %v610, 4
        %v638 = vsel %vm355, %v622, %v637
        %v640 = vunpack.c.l.s4 1934713408
        %v641 = vunpack.c.0.s8 %v640
        %v642 = vperm.slane %v636, %v641
        %v644 = vunpack.c.l.s4 1934713408
        %v645 = vunpack.c.0.s8 %v644
        %v646 = vperm.slane %v638, %v645
        %v647 = vrot.slane %v630, 4
        %v648 = vsel %vm355, 0.0, %v647
        %v649 = vrot.slane %v634, 4
        %v650 = vsel %vm355, 0.0, %v649
        %v651 = vrot.slane %v642, 4
        %v652 = vsel %vm355, 0.0, %v651
        %v653 = vrot.slane %v646, 4
        %v654 = vsel %vm355, 0.0, %v653
        %v655 = vsel %vm355, %v649, %v630
        %v657 = vunpack.c.l.s4 1983009808
        %v658 = vunpack.c.0.s8 %v657
        %v659 = vperm.slane %v655, %v658
        %v660 = vrot.slane %v650, 4
        %v661 = vsel %vm355, %v660, %v648
        %v663 = vunpack.c.l.s4 1983009808
        %v664 = vunpack.c.0.s8 %v663
        %v665 = vperm.slane %v661, %v664
        %v666 = vsel %vm355, %v653, %v642
        %v668 = vunpack.c.l.s4 1983009808
        %v669 = vunpack.c.0.s8 %v668
        %v670 = vperm.slane %v666, %v669
        %v671 = vrot.slane %v654, 4
        %v672 = vsel %vm355, %v671, %v652
        %v674 = vunpack.c.l.s4 1983009808
        %v675 = vunpack.c.0.s8 %v674
        %v676 = vperm.slane %v672, %v675
        %v677 = vrot.slane %v665, 4
        %v678 = vsel %vm355, %v677, %v659
        %v679 = vrot.slane %v659, 4
        %v680 = vsel %vm355, %v665, %v679
        %v682 = vunpack.c.l.s4 1934713408
        %v683 = vunpack.c.0.s8 %v682
        %v684 = vperm.slane %v678, %v683
        %v686 = vunpack.c.l.s4 1934713408
        %v687 = vunpack.c.0.s8 %v686
        %v688 = vperm.slane %v680, %v687
        %v689 = vrot.slane %v676, 4
        %v690 = vsel %vm355, %v689, %v670
        %v691 = vrot.slane %v670, 4
        %v692 = vsel %vm355, %v676, %v691
        %v694 = vunpack.c.l.s4 1934713408
        %v695 = vunpack.c.0.s8 %v694
        %v696 = vperm.slane %v690, %v695
        %v698 = vunpack.c.l.s4 1934713408
        %v699 = vunpack.c.0.s8 %v698
        %v700 = vperm.slane %v692, %v699
        %v701 = vrot.slane %v696, 4
        %v702 = vsel %vm355, %v701, %v684
        %v703 = vrot.slane %v684, 4
        %v704 = vsel %vm355, %v696, %v703
        %v705 = vrot.slane %v700, 4
        %v706 = vsel %vm355, %v705, %v688
        %v707 = vrot.slane %v688, 4
        %v708 = vsel %vm355, %v700, %v707
        %vm709 = vcmask 64512
        %v711 = vsel %vm709, %v458, 0
        %v714 = vsel %vm709, %v580, 0
        %716 = vmatpush.xpose.msra.mxu0 0.0
        %717 = vmatpush.xpose.msra.mxu0 0.0
        %718 = vmatpush.xpose.msra.mxu0 0.0
        %719 = vmatpush.xpose.msra.mxu0 0.0
        %720 = vmatpush.xpose.msra.mxu0 0.0
        %721 = vmatpush.xpose.msra.mxu0 0.0
        %722 = vmatpush.xpose.msra.mxu0 0.0
        %723 = vmatpush.xpose.msra.mxu0 0.0
        %724 = vmatpush.xpose.msra.mxu0 0.0
        %725 = vmatpush.xpose.msra.mxu0 0.0
        %726 = vmatpush.xpose.msra.mxu0 0.0
        %727 = vmatpush.xpose.msra.mxu0 0.0
        %728 = vmatpush.xpose.msra.mxu0 0.0
        %729 = vmatpush.xpose.msra.mxu0 0.0
        %730 = vmatpush.xpose.msra.mxu0 0.0
        %731 = vmatpush.xpose.msra.mxu0 %v714
        %732 = vmatmul.f32.gmra.mxu0 %v711
        %v733 = vpop.f32.mrf.mxu0
        %v734 = vadd.f32 0.0, %v733
        %735 = vdwg.mxu0
        %v737 = vsel %vm709, %v460, 0
        %v740 = vsel %vm709, %v582, 0
        %742 = vmatpush.xpose.msra.mxu0 0.0
        %743 = vmatpush.xpose.msra.mxu0 0.0
        %744 = vmatpush.xpose.msra.mxu0 0.0
        %745 = vmatpush.xpose.msra.mxu0 0.0
        %746 = vmatpush.xpose.msra.mxu0 0.0
        %747 = vmatpush.xpose.msra.mxu0 0.0
        %748 = vmatpush.xpose.msra.mxu0 0.0
        %749 = vmatpush.xpose.msra.mxu0 0.0
        %750 = vmatpush.xpose.msra.mxu0 0.0
        %751 = vmatpush.xpose.msra.mxu0 0.0
        %752 = vmatpush.xpose.msra.mxu0 0.0
        %753 = vmatpush.xpose.msra.mxu0 0.0
        %754 = vmatpush.xpose.msra.mxu0 0.0
        %755 = vmatpush.xpose.msra.mxu0 0.0
        %756 = vmatpush.xpose.msra.mxu0 0.0
        %757 = vmatpush.xpose.msra.mxu0 %v740
        %758 = vmatmul.f32.gmra.mxu0 %v737
        %v759 = vpop.f32.mrf.mxu0
        %v760 = vadd.f32 0.0, %v759
        %761 = vdwg.mxu0
        %v763 = vsel %vm709, %v462, 0
        %v766 = vsel %vm709, %v584, 0
        %768 = vmatpush.xpose.msra.mxu0 0.0
        %769 = vmatpush.xpose.msra.mxu0 0.0
        %770 = vmatpush.xpose.msra.mxu0 0.0
        %771 = vmatpush.xpose.msra.mxu0 0.0
        %772 = vmatpush.xpose.msra.mxu0 0.0
        %773 = vmatpush.xpose.msra.mxu0 0.0
        %774 = vmatpush.xpose.msra.mxu0 0.0
        %775 = vmatpush.xpose.msra.mxu0 0.0
        %776 = vmatpush.xpose.msra.mxu0 0.0
        %777 = vmatpush.xpose.msra.mxu0 0.0
        %778 = vmatpush.xpose.msra.mxu0 0.0
        %779 = vmatpush.xpose.msra.mxu0 0.0
        %780 = vmatpush.xpose.msra.mxu0 0.0
        %781 = vmatpush.xpose.msra.mxu0 0.0
        %782 = vmatpush.xpose.msra.mxu0 0.0
        %783 = vmatpush.xpose.msra.mxu0 %v766
        %784 = vmatmul.f32.gmra.mxu0 %v763
        %v785 = vpop.f32.mrf.mxu0
        %v786 = vadd.f32 0.0, %v785
        %787 = vdwg.mxu0
        %v789 = vsel %vm709, %v464, 0
        %v792 = vsel %vm709, %v586, 0
        %794 = vmatpush.xpose.msra.mxu0 0.0
        %795 = vmatpush.xpose.msra.mxu0 0.0
        %796 = vmatpush.xpose.msra.mxu0 0.0
        %797 = vmatpush.xpose.msra.mxu0 0.0
        %798 = vmatpush.xpose.msra.mxu0 0.0
        %799 = vmatpush.xpose.msra.mxu0 0.0
        %800 = vmatpush.xpose.msra.mxu0 0.0
        %801 = vmatpush.xpose.msra.mxu0 0.0
        %802 = vmatpush.xpose.msra.mxu0 0.0
        %803 = vmatpush.xpose.msra.mxu0 0.0
        %804 = vmatpush.xpose.msra.mxu0 0.0
        %805 = vmatpush.xpose.msra.mxu0 0.0
        %806 = vmatpush.xpose.msra.mxu0 0.0
        %807 = vmatpush.xpose.msra.mxu0 0.0
        %808 = vmatpush.xpose.msra.mxu0 0.0
        %809 = vmatpush.xpose.msra.mxu0 %v792
        %810 = vmatmul.f32.gmra.mxu0 %v789
        %v811 = vpop.f32.mrf.mxu0
        %v812 = vadd.f32 0.0, %v811
        %813 = vdwg.mxu0
        %v814 = vmul.f32 %v734, 0.35355338
        %v815 = vmul.f32 %v760, 0.35355338
        %v816 = vmul.f32 %v786, 0.35355338
        %v817 = vmul.f32 %v812, 0.35355338
        %v818 = vsel %vm709, %v814, -inf
        %819 = vmax.xlane.f32.xlu0 %v818
        %v820 = vpop.xlane.xlu0 %819
        %v821 = vsel %vm709, %v815, -inf
        %822 = vmax.xlane.f32.xlu0 %v821
        %v823 = vpop.xlane.xlu0 %822
        %v824 = vsel %vm709, %v816, -inf
        %825 = vmax.xlane.f32.xlu0 %v824
        %v826 = vpop.xlane.xlu0 %825
        %v827 = vsel %vm709, %v817, -inf
        %828 = vmax.xlane.f32.xlu0 %v827
        %v829 = vpop.xlane.xlu0 %828
        %v830 = vsub.f32 %v814, %v820
        %v831 = vsub.f32 %v815, %v823
        %v832 = vsub.f32 %v816, %v826
        %v833 = vsub.f32 %v817, %v829
        %v834 = vmul.f32 %v830, 1.442695
        %v835 = vpow.pop %v834
        %v836 = vmul.f32 %v831, 1.442695
        %v837 = vpow.pop %v836
        %v838 = vmul.f32 %v832, 1.442695
        %v839 = vpow.pop %v838
        %v840 = vmul.f32 %v833, 1.442695
        %v841 = vpow.pop %v840
        %v842 = vsel %vm709, %v835, 0.0
        %843 = vadd.xlane.f32.xlu0 %v842
        %v844 = vpop.xlane.xlu0 %843
        %v845 = vsel %vm709, %v837, 0.0
        %846 = vadd.xlane.f32.xlu0 %v845
        %v847 = vpop.xlane.xlu0 %846
        %v848 = vsel %vm709, %v839, 0.0
        %849 = vadd.xlane.f32.xlu0 %v848
        %v850 = vpop.xlane.xlu0 %849
        %v851 = vsel %vm709, %v841, 0.0
        %852 = vadd.xlane.f32.xlu0 %v851
        %v853 = vpop.xlane.xlu0 %852
        %v854 = vrcp.pop %v844
        %v855 = vrcp.pop %v847
        %v856 = vrcp.pop %v850
        %v857 = vrcp.pop %v853
        %v858 = vmul.f32 %v835, %v854
        %v859 = vmul.f32 %v837, %v855
        %v860 = vmul.f32 %v839, %v856
        %v861 = vmul.f32 %v841, %v857
        %v863 = vsel %vm709, %v858, 0
        %865 = vmatpush.msra.mxu0 0.0
        %866 = vmatpush.msra.mxu0 0.0
        %867 = vmatpush.msra.mxu0 0.0
        %868 = vmatpush.msra.mxu0 0.0
        %869 = vmatpush.msra.mxu0 0.0
        %870 = vmatpush.msra.mxu0 0.0
        %871 = vmatpush.msra.mxu0 0.0
        %872 = vmatpush.msra.mxu0 0.0
        %873 = vmatpush.msra.mxu0 0.0
        %874 = vmatpush.msra.mxu0 0.0
        %875 = vmatpush.msra.mxu0 0.0
        %876 = vmatpush.msra.mxu0 0.0
        %877 = vmatpush.msra.mxu0 0.0
        %878 = vmatpush.msra.mxu0 0.0
        %879 = vmatpush.msra.mxu0 0.0
        %880 = vmatpush.msra.mxu0 %v702
        %881 = vmatmul.f32.gmra.mxu0 %v863
        %v882 = vpop.f32.mrf.mxu0
        %v883 = vadd.f32 0.0, %v882
        %884 = vdwg.mxu0
        %v886 = vsel %vm709, %v859, 0
        %888 = vmatpush.msra.mxu0 0.0
        %889 = vmatpush.msra.mxu0 0.0
        %890 = vmatpush.msra.mxu0 0.0
        %891 = vmatpush.msra.mxu0 0.0
        %892 = vmatpush.msra.mxu0 0.0
        %893 = vmatpush.msra.mxu0 0.0
        %894 = vmatpush.msra.mxu0 0.0
        %895 = vmatpush.msra.mxu0 0.0
        %896 = vmatpush.msra.mxu0 0.0
        %897 = vmatpush.msra.mxu0 0.0
        %898 = vmatpush.msra.mxu0 0.0
        %899 = vmatpush.msra.mxu0 0.0
        %900 = vmatpush.msra.mxu0 0.0
        %901 = vmatpush.msra.mxu0 0.0
        %902 = vmatpush.msra.mxu0 0.0
        %903 = vmatpush.msra.mxu0 %v704
        %904 = vmatmul.f32.gmra.mxu0 %v886
        %v905 = vpop.f32.mrf.mxu0
        %v906 = vadd.f32 0.0, %v905
        %907 = vdwg.mxu0
        %v909 = vsel %vm709, %v860, 0
        %911 = vmatpush.msra.mxu0 0.0
        %912 = vmatpush.msra.mxu0 0.0
        %913 = vmatpush.msra.mxu0 0.0
        %914 = vmatpush.msra.mxu0 0.0
        %915 = vmatpush.msra.mxu0 0.0
        %916 = vmatpush.msra.mxu0 0.0
        %917 = vmatpush.msra.mxu0 0.0
        %918 = vmatpush.msra.mxu0 0.0
        %919 = vmatpush.msra.mxu0 0.0
        %920 = vmatpush.msra.mxu0 0.0
        %921 = vmatpush.msra.mxu0 0.0
        %922 = vmatpush.msra.mxu0 0.0
        %923 = vmatpush.msra.mxu0 0.0
        %924 = vmatpush.msra.mxu0 0.0
        %925 = vmatpush.msra.mxu0 0.0
        %926 = vmatpush.msra.mxu0 %v706
        %927 = vmatmul.f32.gmra.mxu0 %v909
        %v928 = vpop.f32.mrf.mxu0
        %v929 = vadd.f32 0.0, %v928
        %930 = vdwg.mxu0
        %v932 = vsel %vm709, %v861, 0
        %934 = vmatpush.msra.mxu0 0.0
        %935 = vmatpush.msra.mxu0 0.0
        %936 = vmatpush.msra.mxu0 0.0
        %937 = vmatpush.msra.mxu0 0.0
        %938 = vmatpush.msra.mxu0 0.0
        %939 = vmatpush.msra.mxu0 0.0
        %940 = vmatpush.msra.mxu0 0.0
        %941 = vmatpush.msra.mxu0 0.0
        %942 = vmatpush.msra.mxu0 0.0
        %943 = vmatpush.msra.mxu0 0.0
        %944 = vmatpush.msra.mxu0 0.0
        %945 = vmatpush.msra.mxu0 0.0
        %946 = vmatpush.msra.mxu0 0.0
        %947 = vmatpush.msra.mxu0 0.0
        %948 = vmatpush.msra.mxu0 0.0
        %949 = vmatpush.msra.mxu0 %v708
        %950 = vmatmul.f32.gmra.mxu0 %v932
        %v951 = vpop.f32.mrf.mxu0
        %v952 = vadd.f32 0.0, %v951
        %953 = vdwg.mxu0
        %v954 = vrot.slane %v929, 4
        %v955 = vsel %vm355, %v954, %v883
        %v956 = vrot.slane %v883, 4
        %v957 = vsel %vm355, %v929, %v956
        %v959 = vunpack.c.l.s4 1983009808
        %v960 = vunpack.c.0.s8 %v959
        %v961 = vperm.slane %v955, %v960
        %v963 = vunpack.c.l.s4 1983009808
        %v964 = vunpack.c.0.s8 %v963
        %v965 = vperm.slane %v957, %v964
        %v966 = vrot.slane %v952, 4
        %v967 = vsel %vm355, %v966, %v906
        %v968 = vrot.slane %v906, 4
        %v969 = vsel %vm355, %v952, %v968
        %v971 = vunpack.c.l.s4 1983009808
        %v972 = vunpack.c.0.s8 %v971
        %v973 = vperm.slane %v967, %v972
        %v975 = vunpack.c.l.s4 1983009808
        %v976 = vunpack.c.0.s8 %v975
        %v977 = vperm.slane %v969, %v976
        %v978 = vrot.slane %v973, 4
        %v979 = vsel %vm355, %v978, %v961
        %v980 = vrot.slane %v961, 4
        %v981 = vsel %vm355, %v973, %v980
        %v983 = vunpack.c.l.s4 1934713408
        %v984 = vunpack.c.0.s8 %v983
        %v985 = vperm.slane %v979, %v984
        %v987 = vunpack.c.l.s4 1934713408
        %v988 = vunpack.c.0.s8 %v987
        %v989 = vperm.slane %v981, %v988
        %v990 = vrot.slane %v977, 4
        %v991 = vsel %vm355, %v990, %v965
        %v992 = vrot.slane %v965, 4
        %v993 = vsel %vm355, %v977, %v992
        %v995 = vunpack.c.l.s4 1934713408
        %v996 = vunpack.c.0.s8 %v995
        %v997 = vperm.slane %v991, %v996
        %v999 = vunpack.c.l.s4 1934713408
        %v1000 = vunpack.c.0.s8 %v999
        %v1001 = vperm.slane %v993, %v1000
        %v1002 = vrot.slane %v985, 4
        %v1003 = vsel %vm355, 0.0, %v1002
        %v1004 = vrot.slane %v989, 4
        %v1005 = vsel %vm355, 0.0, %v1004
        %v1006 = vrot.slane %v997, 4
        %v1007 = vsel %vm355, 0.0, %v1006
        %v1008 = vrot.slane %v1001, 4
        %v1009 = vsel %vm355, 0.0, %v1008
        %v1010 = vsel %vm355, %v1004, %v985
        %v1012 = vunpack.c.l.s4 1983009808
        %v1013 = vunpack.c.0.s8 %v1012
        %v1014 = vperm.slane %v1010, %v1013
        %v1015 = vrot.slane %v1005, 4
        %v1016 = vsel %vm355, %v1015, %v1003
        %v1018 = vunpack.c.l.s4 1983009808
        %v1019 = vunpack.c.0.s8 %v1018
        %v1020 = vperm.slane %v1016, %v1019
        %v1021 = vsel %vm355, %v1008, %v997
        %v1023 = vunpack.c.l.s4 1983009808
        %v1024 = vunpack.c.0.s8 %v1023
        %v1025 = vperm.slane %v1021, %v1024
        %v1026 = vrot.slane %v1009, 4
        %v1027 = vsel %vm355, %v1026, %v1007
        %v1029 = vunpack.c.l.s4 1983009808
        %v1030 = vunpack.c.0.s8 %v1029
        %v1031 = vperm.slane %v1027, %v1030
        %v1032 = vrot.slane %v1020, 4
        %v1033 = vsel %vm355, %v1032, %v1014
        %v1034 = vrot.slane %v1014, 4
        %v1035 = vsel %vm355, %v1020, %v1034
        %v1037 = vunpack.c.l.s4 1934713408
        %v1038 = vunpack.c.0.s8 %v1037
        %v1039 = vperm.slane %v1033, %v1038
        %v1041 = vunpack.c.l.s4 1934713408
        %v1042 = vunpack.c.0.s8 %v1041
        %v1043 = vperm.slane %v1035, %v1042
        %v1044 = vrot.slane %v1031, 4
        %v1045 = vsel %vm355, %v1044, %v1025
        %v1046 = vrot.slane %v1025, 4
        %v1047 = vsel %vm355, %v1031, %v1046
        %v1049 = vunpack.c.l.s4 1934713408
        %v1050 = vunpack.c.0.s8 %v1049
        %v1051 = vperm.slane %v1045, %v1050
        %v1053 = vunpack.c.l.s4 1934713408
        %v1054 = vunpack.c.0.s8 %v1053
        %v1055 = vperm.slane %v1047, %v1054
        %v1056 = vrot.slane %v1051, 4
        %v1057 = vsel %vm355, %v1056, %v1039
        %v1058 = vrot.slane %v1039, 4
        %v1059 = vsel %vm355, %v1051, %v1058
        %v1060 = vrot.slane %v1055, 4
        %v1061 = vsel %vm355, %v1060, %v1043
        %v1062 = vrot.slane %v1043, 4
        %v1063 = vsel %vm355, %v1055, %v1062
        %1065 = vrot.lane.b32.xlu0 %v1059, 8
        %v1066 = vpop.permute.xlu0 %1065
        %1069 = vrot.lane.b32.xlu0 %v1061, 16
        %v1070 = vpop.permute.xlu0 %1069
        %1073 = vrot.lane.b32.xlu0 %v1063, 24
        %v1074 = vpop.permute.xlu0 %1073
        %v1076 = vsel %vm709, %v1057, %v1066
        %vm1077 = vcmask 130048
        %v1078 = vsel %vm1077, %v1076, %v1070
        %vm1079 = vcmask 195584
        %v1080 = vsel %vm1079, %v1078, %v1074
        %v1081 = vpack.c.bf16 %v1080, %v1080
        %v1082 = vld [vmem:[%s2 + $0x4] sm:$0xf]
        %v1083 = vld [vmem:[%s2 + $0x14] sm:$0xf]
        %v1084 = vld [vmem:[%s2 + $0x24] sm:$0xf]
        %v1085 = vld [vmem:[%s2 + $0x34] sm:$0xf]
        %v1086 = vld [vmem:[%s4 + $0x9] sm:$0x1]
        %v1087 = vperm.slane %v1086, 0
        %v1092 = vunpack.c.l.b16 %v1082
        %v1093 = vunpack.c.l.b16 %v1083
        %v1094 = vunpack.c.l.b16 %v1084
        %v1095 = vunpack.c.l.b16 %v1085
        %v1096 = vpack.c.b16 %v1093, %v1092
        %v1097 = vpack.c.b16 %v1095, %v1094
        %v1101 = vsel %vm327, %v1081, 0
        %1103 = vmatpush.bf16.msra.mxu0 0
        %1104 = vmatpush.bf16.msra.mxu0 0
        %1105 = vmatpush.bf16.msra.mxu0 0
        %1106 = vmatpush.bf16.msra.mxu0 0
        %1107 = vmatpush.bf16.msra.mxu0 0
        %1108 = vmatpush.bf16.msra.mxu0 0
        %1109 = vmatpush.bf16.msra.mxu0 %v1097
        %1110 = vmatpush.bf16.msra.mxu0 %v1096
        %1111 = vmatmul.bf16.gmra.mxu0 %v1101
        %v1112 = vpop.f32.mrf.mxu0
        %v1113 = vadd.f32 %v1087, %v1112
        %v1114 = vpop.f32.mrf.mxu0
        %1115 = vdwg.mxu0
        %v1116 = vadd.f32 %v305, %v1113
        %v1117 = vld [vmem:[%s4 + $0xa] sm:$0x1]
        %v1118 = vld [vmem:[%s4 + $0xb] sm:$0x1]
        %v1119 = vsel %vm327, %v1116, 0.0
        %1120 = vadd.xlane.f32.xlu0 %v1119
        %v1121 = vpop.xlane.xlu0 %1120
        %v1122 = vrcp.pop 32.0
        %v1123 = vmul.f32 32.0, %v1122
        %v1124 = vsub.f32 1.0, %v1123
        %v1125 = vmul.f32 %v1122, %v1124
        %v1126 = vadd.f32 %v1122, %v1125
        %vm1127 = vweird.f32 %v1122
        %v1128 = vsel %vm1127, %v1122, %v1126
        %v1129 = vmul.f32 %v1121, %v1128
        %v1130 = vsub.f32 %v1116, %v1129
        %v1131 = vmul.f32 %v1130, %v1130
        %v1132 = vsel %vm327, %v1131, 0.0
        %1133 = vadd.xlane.f32.xlu0 %v1132
        %v1134 = vpop.xlane.xlu0 %1133
        %v1135 = vmul.f32 %v1134, %v1128
        %v1136 = vadd.f32 %v1135, 1e-12
        %v1137 = vrsqrt.pop %v1136
        %v1138 = vmul.f32 %v1137, %v1136
        %v1139 = vmul.f32 %v1138, %v1137
        %v1140 = vmul.f32 0.5, %v1139
        %v1141 = vsub.f32 1.5, %v1140
        %v1142 = vmul.f32 %v1137, %v1141
        %vm1143 = vweird.f32 %v1136
        %vm1144 = vweird.f32 %v1137
        %vm1145 = vmor %vm1143, %vm1144
        %v1146 = vsel %vm1145, %v1137, %v1142
        %v1147 = vmul.f32 %v1130, %v1146
        %v1148 = vperm.slane %v1117, 0
        %v1149 = vmul.f32 %v1147, %v1148
        %v1150 = vperm.slane %v1118, 0
        %v1151 = vadd.f32 %v1149, %v1150
        %v1152 = vpack.c.bf16 %v1151, %v1151
        %v1153 = vld [vmem:[%s2 + $0x8] sm:$0xf]
        %v1154 = vld [vmem:[%s2 + $0x18] sm:$0xf]
        %v1155 = vld [vmem:[%s2 + $0x28] sm:$0xf]
        %v1156 = vld [vmem:[%s2 + $0x38] sm:$0xf]
        %v1157 = vld [vmem:[%s4 + $0xc] sm:$0x1]
        %v1158 = vperm.slane %v1157, 0
        %v1163 = vunpack.c.l.b16 %v1153
        %v1164 = vunpack.c.l.b16 %v1154
        %v1165 = vunpack.c.l.b16 %v1155
        %v1166 = vunpack.c.l.b16 %v1156
        %v1167 = vpack.c.b16 %v1164, %v1163
        %v1168 = vpack.c.b16 %v1166, %v1165
        %v1172 = vsel %vm327, %v1152, 0
        %1174 = vmatpush.bf16.msra.mxu0 0
        %1175 = vmatpush.bf16.msra.mxu0 0
        %1176 = vmatpush.bf16.msra.mxu0 0
        %1177 = vmatpush.bf16.msra.mxu0 0
        %1178 = vmatpush.bf16.msra.mxu0 0
        %1179 = vmatpush.bf16.msra.mxu0 0
        %1180 = vmatpush.bf16.msra.mxu0 %v1168
        %1181 = vmatpush.bf16.msra.mxu0 %v1167
        %1182 = vmatmul.bf16.gmra.mxu0 %v1172
        %v1183 = vpop.f32.mrf.mxu0
        %v1184 = vadd.f32 %v1158, %v1183
        %v1185 = vpop.f32.mrf.mxu0
        %1186 = vdwg.mxu0
        %v1187 = vmul.f32 %v1184, %v1184
        %v1188 = vmul.f32 %v1184, %v1187
        %v1189 = vmul.f32 %v1188, 0.044715
        %v1190 = vadd.f32 %v1184, %v1189
        %v1191 = vmul.f32 %v1190, 0.7978846
        %v1192 = vtanh.pop %v1191
        %v1193 = vadd.f32 %v1192, 1.0
        %v1194 = vmul.f32 %v1193, 0.5
        %v1195 = vmul.f32 %v1184, %v1194
        %v1196 = vpack.c.bf16 %v1195, %v1195
        %v1197 = vld [vmem:[%s3] sm:$0xf]
        %v1198 = vld [vmem:[%s3 + $0x4] sm:$0xf]
        %v1199 = vld [vmem:[%s3 + $0x8] sm:$0xf]
        %v1200 = vld [vmem:[%s3 + $0xc] sm:$0xf]
        %v1201 = vld [vmem:[%s3 + $0x10] sm:$0xf]
        %v1202 = vld [vmem:[%s3 + $0x14] sm:$0xf]
        %v1203 = vld [vmem:[%s3 + $0x18] sm:$0xf]
        %v1204 = vld [vmem:[%s3 + $0x1c] sm:$0xf]
        %v1205 = vld [vmem:[%s4 + $0xd] sm:$0x1]
        %v1206 = vperm.slane %v1205, 0
        %v1215 = vunpack.c.l.b16 %v1197
        %v1216 = vunpack.c.l.b16 %v1198
        %v1217 = vunpack.c.l.b16 %v1199
        %v1218 = vunpack.c.l.b16 %v1200
        %v1219 = vunpack.c.l.b16 %v1201
        %v1220 = vunpack.c.l.b16 %v1202
        %v1221 = vunpack.c.l.b16 %v1203
        %v1222 = vunpack.c.l.b16 %v1204
        %v1223 = vpack.c.b16 %v1216, %v1215
        %v1224 = vpack.c.b16 %v1218, %v1217
        %v1225 = vpack.c.b16 %v1220, %v1219
        %v1226 = vpack.c.b16 %v1222, %v1221
        %vm1231 = vcmask 523264
        %v1233 = vsel %vm1231, %v1196, 0
        %1235 = vmatpush.bf16.msra.mxu0 0
        %1236 = vmatpush.bf16.msra.mxu0 0
        %1237 = vmatpush.bf16.msra.mxu0 0
        %1238 = vmatpush.bf16.msra.mxu0 0
        %1239 = vmatpush.bf16.msra.mxu0 %v1226
        %1240 = vmatpush.bf16.msra.mxu0 %v1225
        %1241 = vmatpush.bf16.msra.mxu0 %v1224
        %1242 = vmatpush.bf16.msra.mxu0 %v1223
        %1243 = vmatmul.bf16.gmra.mxu0 %v1233
        %v1244 = vpop.f32.mrf.mxu0
        %v1245 = vadd.f32 %v1206, %v1244
        %v1246 = vpop.f32.mrf.mxu0
        %1247 = vdwg.mxu0
        %v1248 = vadd.f32 %v1151, %v1245
        %v1249 = vld [vmem:[%s4 + $0xe] sm:$0x1]
        %v1250 = vld [vmem:[%s4 + $0xf] sm:$0x1]
        %v1251 = vsel %vm327, %v1248, 0.0
        %1252 = vadd.xlane.f32.xlu0 %v1251
        %v1253 = vpop.xlane.xlu0 %1252
        %v1254 = vmul.f32 %v1253, %v1128
        %v1255 = vsub.f32 %v1248, %v1254
        %v1256 = vmul.f32 %v1255, %v1255
        %v1257 = vsel %vm327, %v1256, 0.0
        %1258 = vadd.xlane.f32.xlu0 %v1257
        %v1259 = vpop.xlane.xlu0 %1258
        %v1260 = vmul.f32 %v1259, %v1128
        %v1261 = vadd.f32 %v1260, 1e-12
        %v1262 = vrsqrt.pop %v1261
        %v1263 = vmul.f32 %v1262, %v1261
        %v1264 = vmul.f32 %v1263, %v1262
        %v1265 = vmul.f32 0.5, %v1264
        %v1266 = vsub.f32 1.5, %v1265
        %v1267 = vmul.f32 %v1262, %v1266
        %vm1268 = vweird.f32 %v1261
        %vm1269 = vweird.f32 %v1262
        %vm1270 = vmor %vm1268, %vm1269
        %v1271 = vsel %vm1270, %v1262, %v1267
        %v1272 = vmul.f32 %v1255, %v1271
        %v1273 = vperm.slane %v1249, 0
        %v1274 = vmul.f32 %v1272, %v1273
        %v1275 = vperm.slane %v1250, 0
        %v1276 = vadd.f32 %v1274, %v1275
        %v1277 = vpack.c.bf16 %v1276, %v1276
        %v1278 = vld [vmem:[%s2 + $0xc] sm:$0xf]
        %v1279 = vld [vmem:[%s2 + $0x1c] sm:$0xf]
        %v1280 = vld [vmem:[%s2 + $0x2c] sm:$0xf]
        %v1281 = vld [vmem:[%s2 + $0x3c] sm:$0xf]
        %v1282 = vld [vmem:[%s4 + $0x10] sm:$0x1]
        %v1283 = vperm.slane %v1282, 0
        %v1288 = vunpack.c.l.b16 %v1278
        %v1289 = vunpack.c.l.b16 %v1279
        %v1290 = vunpack.c.l.b16 %v1280
        %v1291 = vunpack.c.l.b16 %v1281
        %v1292 = vpack.c.b16 %v1289, %v1288
        %v1293 = vpack.c.b16 %v1291, %v1290
        %v1297 = vsel %vm327, %v1277, 0
        %1299 = vmatpush.bf16.msra.mxu0 0
        %1300 = vmatpush.bf16.msra.mxu0 0
        %1301 = vmatpush.bf16.msra.mxu0 0
        %1302 = vmatpush.bf16.msra.mxu0 0
        %1303 = vmatpush.bf16.msra.mxu0 0
        %1304 = vmatpush.bf16.msra.mxu0 0
        %1305 = vmatpush.bf16.msra.mxu0 %v1293
        %1306 = vmatpush.bf16.msra.mxu0 %v1292
        %1307 = vmatmul.bf16.gmra.mxu0 %v1297
        %v1308 = vpop.f32.mrf.mxu0
        %v1309 = vadd.f32 %v1283, %v1308
        %v1310 = vpop.f32.mrf.mxu0
        %1311 = vdwg.mxu0
        %1312 = vst [vmem:[%s215] sm:$0xff] %v1309
        %s1313 = sand.u32 %s137, 1
        %s1314 = scalar_lea.sflag [#allocation3], %s1313
        %s1315 = sand.u32 %s137, 1
        %s1316 = smul.addr %s1315, 8
        %s1317 = scalar_lea.vmem [#allocation2], %s1316
        // Predicated region
        $region41: #{tpu_custom_call.1} parent=39 // pred_check
          %p1318 = pneg %p147
        $region42: #{tpu_custom_call.1} parent=39 // pred_check_branch
          %1320 = sbr.rel (%p1318) target = $region44
        $region43: #{tpu_custom_call.1} parent=39 // pred_region
          %1322 = vsyncadd %s1314, 0
          %s1323 = smul.addr %s19, 8
          %s1324 = scalar_lea.hbm %s5, %s1323
          %s1326 = sshll.u32 %s1317, 4
          %s1327 = int_to_ptr.vmem [resolvable:$true] %s1326
          %s1328 = sshll.u32 %s1324, 4
          %s1329 = int_to_ptr.hbm [resolvable:$true] %s1328
          %1331 = dma.vmem_to_hbm [thread:$0]  %s1327, 128, %s1329, %s1314
        $region44: #{tpu_custom_call.1} parent=39 // pred_fallthru
          _
      $region40: #{tpu_custom_call.1} parent=5 // pred_fallthru
        _
      %p1332 = scmp.le.s32.totalorder 2, %s14
      // Predicated region
      $region45: #{tpu_custom_call.1} parent=5 // pred_check
        %p1333 = pneg %p1332
      $region46: #{tpu_custom_call.1} parent=5 // pred_check_branch
        %1335 = sbr.rel (%p1333) target = $region48
      $region47: #{tpu_custom_call.1} parent=5 // pred_region
        %s1336 = ssub.s32 %s14, 2
        // Predicated region
        $region49: #{tpu_custom_call.1} parent=47 // pred_check
          %p1337 = pneg %p153
        $region50: #{tpu_custom_call.1} parent=47 // pred_check_branch
          %1339 = sbr.rel (%p1337) target = $region52
        $region51: #{tpu_custom_call.1} parent=47 // pred_region
          %s1340 = sand.u32 %s138, 1
          %s1341 = scalar_lea.sflag [#allocation3], %s1340
          %s1342 = sand.u32 %s138, 1
          %s1343 = smul.addr %s1342, 8
          %s1344 = scalar_lea.vmem [#allocation2], %s1343
          %1346 = dma.done %s1341, 128
        $region52: #{tpu_custom_call.1} parent=47 // pred_fallthru
          _
      $region48: #{tpu_custom_call.1} parent=5 // pred_fallthru
        _
    $region6: #{tpu_custom_call.1} parent=1 // loop_footer
      %s18 = sadd.s32 1, %s14
    $region7: #{tpu_custom_call.1} parent=1 // loop_footer_branch
      %13 = sbr.rel target = $region3
    $region8: #{tpu_custom_call.1} parent=1 // loop_exit
      _
    %1347 = vsyncpa [#allocation3], 1
    %s1348 = scalar_lea.sflag [#allocation3], 1
    %1349 = vsyncpa %s1348, 1

</llo_original>
